<compile_context>
chip_gen: v5e
topology: v5e:2x2
jax: 0.10.0
libtpu: 0.0.40
codegen_flags: <defaults>
</compile_context>

<pallas_src>
import functools

import jax
import jax.numpy as jnp
from jax.experimental import pallas as pl
from jax.experimental.pallas import tpu as pltpu


def _round_up(x, m):
    return (x + m - 1) // m * m


def _cdiv(a, b):
    return -(-a // b)


# --------------------------- generation config ----------------------------- #
def _generation_config():
    """Tile / VMEM-budget table keyed off physical VMEM (v5e/v6e: 128 MiB,
    v7x: 64 MiB per TensorCore).  Falls back to the v7x-safe table if the
    hardware query is unavailable."""
    try:
        vmem_phys = int(pltpu.get_tpu_info().vmem_capacity_bytes)
    except Exception:
        vmem_phys = 64 * 1024 * 1024
    if vmem_phys >= 96 * 1024 * 1024:        # v5e / v6e: 128 MiB VMEM
        return {"tm": 512, "tk": 1024, "vmem_limit": 64 * 1024 * 1024}
    return {"tm": 256, "tk": 512, "vmem_limit": 32 * 1024 * 1024}  # v7x


# ----------------------------- Pallas kernel ------------------------------- #
def _conv_mm_kernel(x_ref, w_ref, b_ref, o_ref, acc_ref, *, apply_lrelu, slope):
    """(TM, TK) x (TK, C_pad) partial matmul with f32 VMEM accumulation.

    Grid = (M_tiles, K_tiles); K is the innermost reduction axis.  acc_ref is
    zeroed at k==0; at k==last the bias add + LeakyReLU epilogue run in f32
    and the lane-dense (C_pad = n*128) tile is stored in o_ref's dtype
    (bf16 for intermediate layers, f32 for the final fc).
    """
    kk = pl.program_id(1)

    @pl.when(kk == 0)
    def _init():
        acc_ref[...] = jnp.zeros_like(acc_ref)

    acc_ref[...] += jnp.dot(
        x_ref[...], w_ref[...], preferred_element_type=jnp.float32
    )

    @pl.when(kk == pl.num_programs(1) - 1)
    def _finalize():
        acc = acc_ref[...] + b_ref[...]
        if apply_lrelu:
            # LeakyReLU with slope < 1: one mul + max instead of cmp+mul+select.
            acc = jnp.maximum(acc, slope * acc)
        o_ref[...] = acc.astype(o_ref.dtype)


def pallas_matmul_bias_lrelu(patches, w_mat, bias, apply_lrelu=True,
                             slope=0.01, out_dtype=jnp.bfloat16):
    """out[:M, :C_out] = lrelu(patches @ w_mat + bias), computed on the MXU."""
    M, K = patches.shape
    Kw, C_out = w_mat.shape
    assert K == Kw

    cfg = _generation_config()
    # Lane-dense output: pad channel dim up to a multiple of 128.
    c_pad = _round_up(max(C_out, 128), 128)
    out_bytes = jnp.dtype(out_dtype).itemsize

    # M tiling: multiples of 16 (bf16 sublane pairs), capped so there are
    # >= 2 parallel M tiles whenever M allows (v7x megacore sharding).
    tm = min(cfg["tm"], _round_up(M, 16))
    if M > 16:
        tm = min(tm, _round_up(_cdiv(M, 2), 16))
    tm = max(tm, 16)
    m_pad = _round_up(M, tm)

    # K tiling: a single resident full-K weight block when the (conservative)
    # double-buffered working-set estimate fits the generation's budget, so
    # the weight is DMA'd once per call; else 128-aligned K strips (which get
    # re-streamed from HBM once per M tile).
    budget = int(0.75 * cfg["vmem_limit"])

    def _vmem_need(tk_):
        return (2 * tm * tk_ * 2              # bf16 patch tile, double-buffered
                + 2 * tk_ * c_pad * 2         # bf16 weight block
                + tm * c_pad * 4              # f32 accumulator scratch
                + 2 * tm * c_pad * out_bytes  # output tile, double-buffered
                + 2 * c_pad * 4)              # bias

    if _vmem_need(K) <= budget:
        tk, k_pad = K, K
    else:
        tk = max(128, cfg["tk"])
        while tk > 128 and _vmem_need(tk) > budget:
            tk //= 2
        k_pad = _round_up(K, tk)

    # bf16 MXU inputs (patches/weights normally arrive bf16 already so these
    # casts are no-ops); zero-pad is inert for the matmul and sliced off below.
    x = patches if patches.dtype == jnp.bfloat16 else patches.astype(jnp.bfloat16)
    w = w_mat if w_mat.dtype == jnp.bfloat16 else w_mat.astype(jnp.bfloat16)
    if (m_pad, k_pad) != (M, K):
        x = jnp.pad(x, ((0, m_pad - M), (0, k_pad - K)))
    if (k_pad, c_pad) != (K, C_out):
        w = jnp.pad(w, ((0, k_pad - K), (0, c_pad - C_out)))
    b2 = jnp.pad(bias.astype(jnp.float32).reshape(1, C_out),
                 ((0, 0), (0, c_pad - C_out)))

    kern = functools.partial(_conv_mm_kernel, apply_lrelu=apply_lrelu,
                             slope=slope)
    out = pl.pallas_call(
        kern,
        out_shape=jax.ShapeDtypeStruct((m_pad, c_pad), out_dtype),
        grid=(m_pad // tm, k_pad // tk),
        in_specs=[
            pl.BlockSpec((tm, tk), lambda i, k: (i, k)),       # patch tile
            pl.BlockSpec((tk, c_pad), lambda i, k: (k, 0)),    # weight block
            pl.BlockSpec((1, c_pad), lambda i, k: (0, 0)),     # bias (resident)
        ],
        out_specs=pl.BlockSpec((tm, c_pad), lambda i, k: (i, 0)),
        scratch_shapes=[pltpu.VMEM((tm, c_pad), jnp.float32)],
        compiler_params=pltpu.CompilerParams(
            dimension_semantics=("parallel", "arbitrary"),
            vmem_limit_bytes=cfg["vmem_limit"],
        ),
    )(x, w, b2)
    return out[:M, :C_out]


# ------------------------------ JAX glue ----------------------------------- #
def _l2_normalize(v, eps=1e-12):
    return v / (jnp.linalg.norm(v) + eps)


def spectral_norm_weight(w, u):
    # SAGAN-style SpectralNorm: 1 power iteration, w reshaped to (C_out, -1).
    c_out = w.shape[0]
    w_mat = w.reshape(c_out, -1)
    v = _l2_normalize(w_mat.T @ u)
    u_new = _l2_normalize(w_mat @ v)
    sigma = u_new @ (w_mat @ v)
    return w / sigma


def im2col(x_nhwc, k, stride, pad):
    # Runs entirely in the input dtype (bf16): the k*k-expanded patch tensor
    # is written/read at half the bytes of the previous f32 version.
    # TODO(synk): fuse tap extraction into the Pallas kernel (manual strided
    # DMA from an HBM-resident input, memory_space=pl.ANY) to avoid
    # materializing the expanded patch tensor in HBM at large batch/image
    # sizes entirely.
    x = jnp.pad(x_nhwc, ((0, 0), (pad, pad), (pad, pad), (0, 0))) if pad else x_nhwc
    n, h, w, c = x.shape
    h_out = (h - k) // stride + 1
    w_out = (w - k) // stride + 1
    cols = []
    for ky in range(k):
        for kx in range(k):
            cols.append(
                x[:, ky:ky + stride * (h_out - 1) + 1:stride,
                     kx:kx + stride * (w_out - 1) + 1:stride, :]
            )
    p = jnp.stack(cols, axis=3)  # (N, H_out, W_out, k*k, C) tap-major
    return p.reshape(n * h_out * w_out, k * k * c), (n, h_out, w_out)


# Below this many output rows, per-pallas_call + im2col overhead dwarfs the
# matmul: use a plain dot (same bf16-in / f32-accum numerics) instead.
_PALLAS_MIN_M = 128


def conv_layer(x_nhwc, weight, bias, stride, pad, apply_lrelu, slope=0.01,
               out_dtype=jnp.bfloat16):
    # weight: PyTorch layout (C_out, C_in, kh, kw)
    c_out, c_in, k, _ = weight.shape
    patches, (n, h_out, w_out) = im2col(x_nhwc, k, stride, pad)
    # (C_out, C_in, kh, kw) -> (kh, kw, C_in, C_out) -> (K, C_out), bf16.
    w_mat = jnp.transpose(weight, (2, 3, 1, 0)).reshape(k * k * c_in, c_out)
    w_mat = w_mat.astype(jnp.bfloat16)
    if patches.shape[0] >= _PALLAS_MIN_M:
        out = pallas_matmul_bias_lrelu(patches, w_mat, bias, apply_lrelu,
                                       slope, out_dtype)
    else:
        # Tiny late layers / 1x1 fc: fixed pallas_call overhead dominates.
        out = jnp.dot(patches, w_mat, preferred_element_type=jnp.float32)
        out = out + bias.astype(jnp.float32)[None, :]
        if apply_lrelu:
            out = jnp.maximum(out, slope * out)
        out = out.astype(out_dtype)
    return out.reshape(n, h_out, w_out, c_out)


def discriminator_forward(x_nchw, sn_layers, fc_weight):
    # Cast once to bf16 up front: im2col, padding and all intermediate
    # activations stay bf16; only accumulation/epilogue and the fc output
    # are f32.
    x = jnp.transpose(x_nchw, (0, 2, 3, 1)).astype(jnp.bfloat16)  # NCHW -> NHWC
    for (w, b, u) in sn_layers:
        w_sn = spectral_norm_weight(w, u)
        x = conv_layer(x, w_sn, b, stride=2, pad=1, apply_lrelu=True,
                       slope=0.01, out_dtype=jnp.bfloat16)
    c_out = fc_weight.shape[0]
    x = conv_layer(x, fc_weight, jnp.zeros((c_out,), jnp.float32),
                   stride=1, pad=0, apply_lrelu=False, out_dtype=jnp.float32)
    out = jnp.transpose(x, (0, 3, 1, 2))     # NHWC -> NCHW, (N, C, 1, 1)
    out = out[:, :, 0, 0]                    # drop 1x1 spatial dims explicitly
    if out.shape[0] == 1:                    # match torch .squeeze() exactly
        out = out[0]
    return out


# --------------------------- reference (lax) -------------------------------- #
def reference_forward(x_nchw, sn_layers, fc_weight):
    x = jnp.transpose(x_nchw, (0, 2, 3, 1))
    for (w, b, u) in sn_layers:
        w_sn = spectral_norm_weight(w, u)
        w_hwio = jnp.transpose(w_sn, (2, 3, 1, 0))
        x = jax.lax.conv_general_dilated(
            x, w_hwio, window_strides=(2, 2), padding=((1, 1), (1, 1)),
            dimension_numbers=("NHWC", "HWIO", "NHWC"))
        x = x + b[None, None, None, :]
        x = jnp.where(x >= 0.0, x, 0.01 * x)
    w_hwio = jnp.transpose(fc_weight, (2, 3, 1, 0))
    x = jax.lax.conv_general_dilated(
        x, w_hwio, window_strides=(1, 1), padding=((0, 0), (0, 0)),
        dimension_numbers=("NHWC", "HWIO", "NHWC"))
    out = jnp.transpose(x, (0, 3, 1, 2))[:, :, 0, 0]
    if out.shape[0] == 1:
        out = out[0]
    return out


# --------------------------------- main ------------------------------------- #
if __name__ == "__main__":
    key = jax.random.PRNGKey(0)

    # Small, shape-consistent config (image_size / 2**repeat_num must be int).
    num_classes = 4
    image_size = 32
    conv_dim = 8
    repeat_num = 5
    batch = 2

    # Build SpectralNorm conv stack params deterministically.
    sn_layers = []
    c_in = 3
    c_out = conv_dim
    for i in range(repeat_num):
        key, kw, kb, ku = jax.random.split(key, 4)
        w = 0.05 * jax.random.normal(kw, (c_out, c_in, 4, 4), jnp.float32)
        b = 0.05 * jax.random.normal(kb, (c_out,), jnp.float32)
        u = jax.random.normal(ku, (c_out,), jnp.float32)
        sn_layers.append((w, b, u))
        c_in = c_out
        c_out = c_out * 2
    curr_dim = c_in
    fc_ks = image_size // (2 ** repeat_num)  # = 1 here
    key, kfc = jax.random.split(key)
    fc_weight = 0.05 * jax.random.normal(
        kfc, (num_classes + 1, curr_dim, fc_ks, fc_ks), jnp.float32)

    key, kx = jax.random.split(key)
    x = jax.random.normal(kx, (batch, 3, image_size, image_size), jnp.float32)

    fwd = jax.jit(discriminator_forward)
    out = jax.block_until_ready(fwd(x, sn_layers, fc_weight))

    ref = jax.block_until_ready(reference_forward(x, sn_layers, fc_weight))
    assert out.shape == (batch, num_classes + 1), out.shape
    assert bool(jnp.all(jnp.isfinite(out)))
    # bf16 activations / stores (f32 accumulation) vs the all-f32 lax
    # reference: check the max error normalized by the reference magnitude.
    denom = float(jnp.maximum(jnp.max(jnp.abs(ref)), 1e-6))
    rel_err = float(jnp.max(jnp.abs(out - ref))) / denom
    assert rel_err < 0.1, rel_err

    print("KERNEL_OK")
</pallas_src>

<mosaic_0001>
module attributes {stable_mosaic.version = 11 : i64} {
  func.func @_conv_mm_kernel(%arg0: i32, %arg1: i32, %arg2: memref<256x48xbf16, #tpu.memory_space<vmem>>, %arg3: memref<48x128xbf16, #tpu.memory_space<vmem>>, %arg4: memref<1x128xf32, #tpu.memory_space<vmem>>, %arg5: memref<256x128xbf16, #tpu.memory_space<vmem>>, %arg6: memref<256x128xf32, #tpu.memory_space<vmem>>) attributes {dimension_semantics = [#tpu.dimension_semantics<parallel>, #tpu.dimension_semantics<arbitrary>], iteration_bounds = array<i64: 2, 1>, scalar_prefetch = 0 : i64, scratch_operands = 1 : i64, tpu.core_type = #tpu.core_type<tc>, window_params = [{transform_indices = @transform_0, window_bounds = array<i64: 256, 48>}, {transform_indices = @transform_1, window_bounds = array<i64: 48, 128>}, {pipeline_mode = #tpu.pipeline_mode<synchronous>, transform_indices = @transform_2, window_bounds = array<i64: 1, 128>}, {transform_indices = @transform_3, window_bounds = array<i64: 256, 128>}]} {
    %c0_i32 = arith.constant 0 : i32
    %0 = arith.cmpi eq, %arg1, %c0_i32 : i32
    %1 = arith.extui %0 : i1 to i32
    %c0_i32_0 = arith.constant 0 : i32
    %2 = arith.cmpi ne, %1, %c0_i32_0 : i32
    scf.if %2 {
      %cst_10 = arith.constant 0.000000e+00 : f32
      %12 = vector.broadcast %cst_10 : f32 to vector<256x128xf32>
      %c0_11 = arith.constant 0 : index
      %c0_12 = arith.constant 0 : index
      %13 = vector.load %arg6[%c0_11, %c0_12] : memref<256x128xf32, #tpu.memory_space<vmem>>, vector<256x128xf32>
      tpu.vector_store %arg6[%c0_11, %c0_12], %12 {strides = array<i32>} : memref<256x128xf32, #tpu.memory_space<vmem>>, vector<256x128xf32>,
    } else {
    }
    %c0 = arith.constant 0 : index
    %c0_1 = arith.constant 0 : index
    %3 = vector.load %arg6[%c0, %c0_1] : memref<256x128xf32, #tpu.memory_space<vmem>>, vector<256x128xf32>
    %c0_2 = arith.constant 0 : index
    %c0_3 = arith.constant 0 : index
    %4 = vector.load %arg2[%c0_2, %c0_3] : memref<256x48xbf16, #tpu.memory_space<vmem>>, vector<256x48xbf16>
    %c0_4 = arith.constant 0 : index
    %c0_5 = arith.constant 0 : index
    %5 = vector.load %arg3[%c0_4, %c0_5] : memref<48x128xbf16, #tpu.memory_space<vmem>>, vector<48x128xbf16>
    %cst = arith.constant dense<0.000000e+00> : vector<256x128xf32>
    %6 = tpu.matmul %4, %5, %cst {dimension_numbers = #tpu.dot_dimension_numbers<[1], [0], [0], [1], [0, 0, 1, 1], [], []>} : vector<256x48xbf16>, vector<48x128xbf16>, vector<256x128xf32> -> vector<256x128xf32>
    %7 = arith.addf %3, %6 : vector<256x128xf32>
    %c0_6 = arith.constant 0 : index
    %c0_7 = arith.constant 0 : index
    %8 = vector.load %arg6[%c0_6, %c0_7] : memref<256x128xf32, #tpu.memory_space<vmem>>, vector<256x128xf32>
    tpu.vector_store %arg6[%c0_6, %c0_7], %7 {strides = array<i32>} : memref<256x128xf32, #tpu.memory_space<vmem>>, vector<256x128xf32>,
    %c0_i32_8 = arith.constant 0 : i32
    %9 = arith.cmpi eq, %arg1, %c0_i32_8 : i32
    %10 = arith.extui %9 : i1 to i32
    %c0_i32_9 = arith.constant 0 : i32
    %11 = arith.cmpi ne, %10, %c0_i32_9 : i32
    scf.if %11 {
      %c0_10 = arith.constant 0 : index
      %c0_11 = arith.constant 0 : index
      %12 = vector.load %arg6[%c0_10, %c0_11] : memref<256x128xf32, #tpu.memory_space<vmem>>, vector<256x128xf32>
      %c0_12 = arith.constant 0 : index
      %c0_13 = arith.constant 0 : index
      %13 = vector.load %arg4[%c0_12, %c0_13] : memref<1x128xf32, #tpu.memory_space<vmem>>, vector<1x128xf32>
      %14 = vector.broadcast %13 : vector<1x128xf32> to vector<256x128xf32>
      %15 = arith.addf %12, %14 : vector<256x128xf32>
      %cst_14 = arith.constant 0.00999999977 : f32
      %16 = vector.broadcast %cst_14 : f32 to vector<256x128xf32>
      %17 = arith.mulf %16, %15 : vector<256x128xf32>
      %18 = arith.maximumf %15, %17 : vector<256x128xf32>
      %19 = arith.truncf %18 : vector<256x128xf32> to vector<256x128xbf16>
      %c0_15 = arith.constant 0 : index
      %c0_16 = arith.constant 0 : index
      %20 = vector.load %arg5[%c0_15, %c0_16] : memref<256x128xbf16, #tpu.memory_space<vmem>>, vector<256x128xbf16>
      tpu.vector_store %arg5[%c0_15, %c0_16], %19 {strides = array<i32>} : memref<256x128xbf16, #tpu.memory_space<vmem>>, vector<256x128xbf16>,
    } else {
    }
    return
  }
  func.func @transform_0(%arg0: i32, %arg1: i32) -> (i32, i32) {
    %c0_i32 = arith.constant 0 : i32
    return %arg0, %arg1 : i32, i32
  }
  func.func @transform_1(%arg0: i32, %arg1: i32) -> (i32, i32) {
    %c0_i32 = arith.constant 0 : i32
    %c0_i32_0 = arith.constant 0 : i32
    return %arg1, %c0_i32 : i32, i32
  }
  func.func @transform_2(%arg0: i32, %arg1: i32) -> (i32, i32) {
    %c0_i32 = arith.constant 0 : i32
    %c0_i32_0 = arith.constant 0 : i32
    %c0_i32_1 = arith.constant 0 : i32
    return %c0_i32, %c0_i32_0 : i32, i32
  }
  func.func @transform_3(%arg0: i32, %arg1: i32) -> (i32, i32) {
    %c0_i32 = arith.constant 0 : i32
    %c0_i32_0 = arith.constant 0 : i32
    return %arg0, %c0_i32 : i32, i32
  }
}

module attributes {stable_mosaic.version = 11 : i64} {
  func.func @_conv_mm_kernel(%arg0: i32, %arg1: i32, %arg2: memref<64x128xbf16, #tpu.memory_space<vmem>>, %arg3: memref<128x128xbf16, #tpu.memory_space<vmem>>, %arg4: memref<1x128xf32, #tpu.memory_space<vmem>>, %arg5: memref<64x128xbf16, #tpu.memory_space<vmem>>, %arg6: memref<64x128xf32, #tpu.memory_space<vmem>>) attributes {dimension_semantics = [#tpu.dimension_semantics<parallel>, #tpu.dimension_semantics<arbitrary>], iteration_bounds = array<i64: 2, 1>, scalar_prefetch = 0 : i64, scratch_operands = 1 : i64, tpu.core_type = #tpu.core_type<tc>, window_params = [{transform_indices = @transform_0, window_bounds = array<i64: 64, 128>}, {transform_indices = @transform_1, window_bounds = array<i64: 128, 128>}, {pipeline_mode = #tpu.pipeline_mode<synchronous>, transform_indices = @transform_2, window_bounds = array<i64: 1, 128>}, {transform_indices = @transform_3, window_bounds = array<i64: 64, 128>}]} {
    %c0_i32 = arith.constant 0 : i32
    %0 = arith.cmpi eq, %arg1, %c0_i32 : i32
    %1 = arith.extui %0 : i1 to i32
    %c0_i32_0 = arith.constant 0 : i32
    %2 = arith.cmpi ne, %1, %c0_i32_0 : i32
    scf.if %2 {
      %cst_10 = arith.constant 0.000000e+00 : f32
      %12 = vector.broadcast %cst_10 : f32 to vector<64x128xf32>
      %c0_11 = arith.constant 0 : index
      %c0_12 = arith.constant 0 : index
      %13 = vector.load %arg6[%c0_11, %c0_12] : memref<64x128xf32, #tpu.memory_space<vmem>>, vector<64x128xf32>
      tpu.vector_store %arg6[%c0_11, %c0_12], %12 {strides = array<i32>} : memref<64x128xf32, #tpu.memory_space<vmem>>, vector<64x128xf32>,
    } else {
    }
    %c0 = arith.constant 0 : index
    %c0_1 = arith.constant 0 : index
    %3 = vector.load %arg6[%c0, %c0_1] : memref<64x128xf32, #tpu.memory_space<vmem>>, vector<64x128xf32>
    %c0_2 = arith.constant 0 : index
    %c0_3 = arith.constant 0 : index
    %4 = vector.load %arg2[%c0_2, %c0_3] : memref<64x128xbf16, #tpu.memory_space<vmem>>, vector<64x128xbf16>
    %c0_4 = arith.constant 0 : index
    %c0_5 = arith.constant 0 : index
    %5 = vector.load %arg3[%c0_4, %c0_5] : memref<128x128xbf16, #tpu.memory_space<vmem>>, vector<128x128xbf16>
    %cst = arith.constant dense<0.000000e+00> : vector<64x128xf32>
    %6 = tpu.matmul %4, %5, %cst {dimension_numbers = #tpu.dot_dimension_numbers<[1], [0], [0], [1], [0, 0, 1, 1], [], []>} : vector<64x128xbf16>, vector<128x128xbf16>, vector<64x128xf32> -> vector<64x128xf32>
    %7 = arith.addf %3, %6 : vector<64x128xf32>
    %c0_6 = arith.constant 0 : index
    %c0_7 = arith.constant 0 : index
    %8 = vector.load %arg6[%c0_6, %c0_7] : memref<64x128xf32, #tpu.memory_space<vmem>>, vector<64x128xf32>
    tpu.vector_store %arg6[%c0_6, %c0_7], %7 {strides = array<i32>} : memref<64x128xf32, #tpu.memory_space<vmem>>, vector<64x128xf32>,
    %c0_i32_8 = arith.constant 0 : i32
    %9 = arith.cmpi eq, %arg1, %c0_i32_8 : i32
    %10 = arith.extui %9 : i1 to i32
    %c0_i32_9 = arith.constant 0 : i32
    %11 = arith.cmpi ne, %10, %c0_i32_9 : i32
    scf.if %11 {
      %c0_10 = arith.constant 0 : index
      %c0_11 = arith.constant 0 : index
      %12 = vector.load %arg6[%c0_10, %c0_11] : memref<64x128xf32, #tpu.memory_space<vmem>>, vector<64x128xf32>
      %c0_12 = arith.constant 0 : index
      %c0_13 = arith.constant 0 : index
      %13 = vector.load %arg4[%c0_12, %c0_13] : memref<1x128xf32, #tpu.memory_space<vmem>>, vector<1x128xf32>
      %14 = vector.broadcast %13 : vector<1x128xf32> to vector<64x128xf32>
      %15 = arith.addf %12, %14 : vector<64x128xf32>
      %cst_14 = arith.constant 0.00999999977 : f32
      %16 = vector.broadcast %cst_14 : f32 to vector<64x128xf32>
      %17 = arith.mulf %16, %15 : vector<64x128xf32>
      %18 = arith.maximumf %15, %17 : vector<64x128xf32>
      %19 = arith.truncf %18 : vector<64x128xf32> to vector<64x128xbf16>
      %c0_15 = arith.constant 0 : index
      %c0_16 = arith.constant 0 : index
      %20 = vector.load %arg5[%c0_15, %c0_16] : memref<64x128xbf16, #tpu.memory_space<vmem>>, vector<64x128xbf16>
      tpu.vector_store %arg5[%c0_15, %c0_16], %19 {strides = array<i32>} : memref<64x128xbf16, #tpu.memory_space<vmem>>, vector<64x128xbf16>,
    } else {
    }
    return
  }
  func.func @transform_0(%arg0: i32, %arg1: i32) -> (i32, i32) {
    %c0_i32 = arith.constant 0 : i32
    return %arg0, %arg1 : i32, i32
  }
  func.func @transform_1(%arg0: i32, %arg1: i32) -> (i32, i32) {
    %c0_i32 = arith.constant 0 : i32
    %c0_i32_0 = arith.constant 0 : i32
    return %arg1, %c0_i32 : i32, i32
  }
  func.func @transform_2(%arg0: i32, %arg1: i32) -> (i32, i32) {
    %c0_i32 = arith.constant 0 : i32
    %c0_i32_0 = arith.constant 0 : i32
    %c0_i32_1 = arith.constant 0 : i32
    return %c0_i32, %c0_i32_0 : i32, i32
  }
  func.func @transform_3(%arg0: i32, %arg1: i32) -> (i32, i32) {
    %c0_i32 = arith.constant 0 : i32
    %c0_i32_0 = arith.constant 0 : i32
    return %arg0, %c0_i32 : i32, i32
  }
}

</mosaic_0001>

<llo_original>
// kernel: discriminator_forward.2
$region0: #{discriminator_forward.2}
  #allocation0 [shape = 'u32[]', space=smem, size = 0x4, offset = 0x4, fixed_abs, tag = 'smem constant byte address 0x4 - core index']
  #allocation1 [shape = 'u32[72,128]{1,0:T(1,128)}', space=vmem, size = 0x9000, scoped, tag = 'internal scratch']
  #allocation2 [shape = 'f32[256,128]{1,0:T(8,128)}', space=vmem, size = 0x20000, scoped, tag = 'scratch operand']
  %s0 = inlined_call_operand.vmem [shape: bf16[512,48], index: 0, kind: input, shape index: {}]
  %s1 = inlined_call_operand.vmem [shape: bf16[48,128], index: 1, kind: input, shape index: {}]
  %s2 = inlined_call_operand.vmem [shape: f32[1,128], index: 2, kind: input, shape index: {}]
  %s3 = inlined_call_operand.vmem [shape: bf16[512,128], index: 3, kind: output, shape index: {}]
  %s4 = sld [smem:[#allocation0]]
  $region53: #{discriminator_forward.2} parent=0
    _
  %s6 = ssub.s32 1, %s4
  %s7 = scalar_select 0, %s6, %s4
  loop: start=0, step=1, limit=4
  $region2: #{discriminator_forward.2} parent=0 // loop_pre_header
    _
  $region3: #{discriminator_forward.2} parent=0 // loop_header
    %s9 = sphi 0, %s13
    %p10 = scmp.ge.s32.totalorder %s9, 4
    %s16 = sphi 0, %s28
    %s17 = sphi 0, %s24
    %s18 = sphi 0, %s16
    %s19 = sphi 0, %s17
    %s20 = sphi 0, %s18
    %s21 = sphi 0, %s19
    %s33 = sphi 0, %s35
    %s36 = sphi 0, %s33
    %s37 = sphi 0, %s36
    %s53 = sphi 0, %s37
    %s59 = sphi 0, %s61
    %s62 = sphi 0, %s59
    %s63 = sphi 0, %s62
    %s79 = sphi 0, %s63
    %s83 = sphi 0, %s83
    %s85 = sphi 0, %s83
    %s86 = sphi 0, %s85
    %s100 = sphi 0, %s86
    %s106 = sphi 0, %s108
    %s109 = sphi 0, %s106
    %s110 = sphi 0, %s109
    %s126 = sphi 0, %s110
  $region4: #{discriminator_forward.2} parent=0 // loop_header_branch
    %12 = sbr.rel (%p10) target = $region8
  $region5: #{discriminator_forward.2} parent=0 // loop_body
    %s14 = ssub.s32 %s9, 1
    %s15 = ssub.s32 %s9, 2
    %s22 = sadd.s32 1, %s17
    %p23 = scmp.ge.s32.totalorder %s22, 1
    %s24 = scalar_select %p23, 0, %s22
    %s25 = sadd.s32 1, %s16
    %s26 = scalar_select %p23, %s25, %s16
    %p27 = scmp.ge.s32.totalorder %s26, 2
    %s28 = scalar_select %p27, 0, %s26
    %s29 = ssub.s32 %s16, %s28
    %s30 = ssub.s32 %s17, %s24
    %s31 = sor.u32 %s29, %s30
    %p32 = scmp.eq.s32.totalorder %s31, 0
    %s34 = sadd.s32 %s33, 1
    %s35 = scalar_select %p32, %s33, %s34
    %p38 = pneg %p32
    %p39 = scmp.eq.s32.totalorder %s9, 1
    %p40 = por %p38, %p39
    %p41 = scmp.ne.s32.totalorder %s33, %s36
    %p42 = scmp.eq.s32.totalorder %s9, 0
    %p43 = por %p41, %p42
    %p44 = scmp.ne.s32.totalorder %s33, %s36
    %p45 = scmp.eq.s32.totalorder %s14, 1
    %p46 = por %p44, %p45
    %p47 = scmp.ne.s32.totalorder %s36, %s37
    %p48 = scmp.eq.s32.totalorder %s14, 0
    %p49 = por %p47, %p48
    %p50 = scmp.ne.s32.totalorder %s36, %s37
    %p51 = scmp.eq.s32.totalorder %s15, 1
    %p52 = por %p50, %p51
    %p54 = scmp.ne.s32.totalorder %s37, %s53
    %p55 = scmp.eq.s32.totalorder %s15, 0
    %p56 = por %p54, %p55
    %s57 = ssub.s32 %s17, %s24
    %p58 = scmp.eq.s32.totalorder %s57, 0
    %s60 = sadd.s32 %s59, 1
    %s61 = scalar_select %p58, %s59, %s60
    %p64 = pneg %p58
    %p65 = scmp.eq.s32.totalorder %s9, 1
    %p66 = por %p64, %p65
    %p67 = scmp.ne.s32.totalorder %s59, %s62
    %p68 = scmp.eq.s32.totalorder %s9, 0
    %p69 = por %p67, %p68
    %p70 = scmp.ne.s32.totalorder %s59, %s62
    %p71 = scmp.eq.s32.totalorder %s14, 1
    %p72 = por %p70, %p71
    %p73 = scmp.ne.s32.totalorder %s62, %s63
    %p74 = scmp.eq.s32.totalorder %s14, 0
    %p75 = por %p73, %p74
    %p76 = scmp.ne.s32.totalorder %s62, %s63
    %p77 = scmp.eq.s32.totalorder %s15, 1
    %p78 = por %p76, %p77
    %p80 = scmp.ne.s32.totalorder %s63, %s79
    %p81 = scmp.eq.s32.totalorder %s15, 0
    %p82 = por %p80, %p81
    %s84 = sadd.s32 %s83, 1
    %p87 = scmp.eq.s32.totalorder %s9, 1
    %p88 = scmp.ne.s32.totalorder %s83, %s85
    %p89 = scmp.eq.s32.totalorder %s9, 0
    %p90 = por %p88, %p89
    %p91 = scmp.ne.s32.totalorder %s83, %s85
    %p92 = scmp.eq.s32.totalorder %s14, 1
    %p93 = por %p91, %p92
    %p94 = scmp.ne.s32.totalorder %s85, %s86
    %p95 = scmp.eq.s32.totalorder %s14, 0
    %p96 = por %p94, %p95
    %p97 = scmp.ne.s32.totalorder %s85, %s86
    %p98 = scmp.eq.s32.totalorder %s15, 1
    %p99 = por %p97, %p98
    %p101 = scmp.ne.s32.totalorder %s86, %s100
    %p102 = scmp.eq.s32.totalorder %s15, 0
    %p103 = por %p101, %p102
    %s104 = ssub.s32 %s16, %s28
    %p105 = scmp.eq.s32.totalorder %s104, 0
    %s107 = sadd.s32 %s106, 1
    %s108 = scalar_select %p105, %s106, %s107
    %p111 = pneg %p105
    %p112 = scmp.eq.s32.totalorder %s9, 1
    %p113 = por %p111, %p112
    %p114 = scmp.ne.s32.totalorder %s106, %s109
    %p115 = scmp.eq.s32.totalorder %s9, 0
    %p116 = por %p114, %p115
    %p117 = scmp.ne.s32.totalorder %s106, %s109
    %p118 = scmp.eq.s32.totalorder %s14, 1
    %p119 = por %p117, %p118
    %p120 = scmp.ne.s32.totalorder %s109, %s110
    %p121 = scmp.eq.s32.totalorder %s14, 0
    %p122 = por %p120, %p121
    %p123 = scmp.ne.s32.totalorder %s109, %s110
    %p124 = scmp.eq.s32.totalorder %s15, 1
    %p125 = por %p123, %p124
    %p127 = scmp.ne.s32.totalorder %s110, %s126
    %p128 = scmp.eq.s32.totalorder %s15, 0
    %p129 = por %p127, %p128
    %p130 = scmp.le.s32.totalorder 1, %s9
    %p131 = scmp.lt.s32.totalorder %s9, 3
    %p132 = pnand %p130, %p131
    %p133 = pneg %p132
    // Predicated region
    $region9: #{discriminator_forward.2} parent=5 // pred_check
      _
    $region10: #{discriminator_forward.2} parent=5 // pred_check_branch
      %135 = sbr.rel (%p132) target = $region12
    $region11: #{discriminator_forward.2} parent=5 // pred_region
      %s136 = ssub.s32 %s9, 1
      // Predicated region
      $region13: #{discriminator_forward.2} parent=11 // pred_check
        %p137 = pneg %p75
      $region14: #{discriminator_forward.2} parent=11 // pred_check_branch
        %139 = sbr.rel (%p137) target = $region16
      $region15: #{discriminator_forward.2} parent=11 // pred_region
        %s140 = smul.u32 6, %s19
        %p141 = scmp.lt.s32.totalorder %s140, 5
        %s142 = scalar_select %p141, %s140, 5
        %s143 = smul.addr %s142, 4
        %s144 = scalar_lea.vmem %s1, %s143
        %s145 = smul.u32 6, %s19
      $region16: #{discriminator_forward.2} parent=11 // pred_fallthru
        _
      // Predicated region
      $region17: #{discriminator_forward.2} parent=11 // pred_check
        %p146 = pneg %p96
      $region18: #{discriminator_forward.2} parent=11 // pred_check_branch
        %148 = sbr.rel (%p146) target = $region20
      $region19: #{discriminator_forward.2} parent=11 // pred_region
        _
      $region20: #{discriminator_forward.2} parent=11 // pred_fallthru
        _
    $region12: #{discriminator_forward.2} parent=5 // pred_fallthru
      _
    %p149 = scmp.lt.s32.totalorder %s9, 2
    // Predicated region
    $region21: #{discriminator_forward.2} parent=5 // pred_check
      %p150 = pneg %p149
    $region22: #{discriminator_forward.2} parent=5 // pred_check_branch
      %152 = sbr.rel (%p150) target = $region24
    $region23: #{discriminator_forward.2} parent=5 // pred_region
      // Predicated region
      $region25: #{discriminator_forward.2} parent=23 // pred_check
        %p153 = pneg %p43
      $region26: #{discriminator_forward.2} parent=23 // pred_check_branch
        %155 = sbr.rel (%p153) target = $region28
      $region27: #{discriminator_forward.2} parent=23 // pred_region
        %s156 = smul.u32 32, %s16
        %p157 = scmp.lt.s32.totalorder %s156, 63
        %s158 = scalar_select %p157, %s156, 63
        %p159 = scmp.lt.s32.totalorder %s17, 0
        %s160 = scalar_select %p159, %s17, 0
        %s161 = sadd.s32 %s160, %s158
        %s162 = smul.addr %s161, 4
        %s163 = scalar_lea.vmem %s0, %s162
        %s164 = smul.u32 32, %s16
      $region28: #{discriminator_forward.2} parent=23 // pred_fallthru
        _
    $region24: #{discriminator_forward.2} parent=5 // pred_fallthru
      _
    %p165 = scmp.le.s32.totalorder 1, %s9
    %p166 = scmp.lt.s32.totalorder %s9, 3
    %p167 = pnand %p165, %p166
    %p168 = pneg %p167
    // Predicated region
    $region29: #{discriminator_forward.2} parent=5 // pred_check
      _
    $region30: #{discriminator_forward.2} parent=5 // pred_check_branch
      %170 = sbr.rel (%p167) target = $region32
    $region31: #{discriminator_forward.2} parent=5 // pred_region
      %s171 = ssub.s32 %s9, 1
      %s172 = smul.u32 32, %s18
      %p173 = scmp.lt.s32.totalorder %s172, 63
      %s174 = scalar_select %p173, %s172, 63
      %p175 = scmp.lt.s32.totalorder %s19, 0
      %s176 = scalar_select %p175, %s19, 0
      %s177 = sadd.s32 %s176, %s174
      %s178 = smul.addr %s177, 4
      %s179 = scalar_lea.vmem %s0, %s178
      %p180 = pneg %p49
      %p181 = pneg %p46
      %s182 = smul.u32 6, %s19
      %p183 = scmp.lt.s32.totalorder %s182, 5
      %s184 = scalar_select %p183, %s182, 5
      %s185 = smul.addr %s184, 4
      %s186 = scalar_lea.vmem %s1, %s185
      %p187 = pneg %p75
      %p188 = pneg %p72
      %p189 = pneg %p96
      %p190 = pneg %p93
      %p191 = pneg %p122
      %p192 = pneg %p119
      %s193 = smul.u32 32, %s18
      %p194 = scmp.lt.s32.totalorder %s193, 63
      %s195 = scalar_select %p194, %s193, 63
      %s196 = smul.addr %s195, 4
      %s197 = scalar_lea.vmem %s3, %s196
      %s198 = smul.u32 32, %s18
      %p199 = scmp.lt.s32.totalorder %s198, 63
      %s200 = scalar_select %p199, %s198, 63
      %p201 = scmp.lt.s32.totalorder %s19, 0
      %s202 = scalar_select %p201, %s19, 0
      %s203 = sadd.s32 %s202, %s200
      %s204 = smul.addr %s203, 4
      %s205 = scalar_lea.vmem %s0, %s204
      %s206 = smul.u32 32, %s18
      %s207 = smul.u32 6, %s19
      %p208 = scmp.lt.s32.totalorder %s207, 5
      %s209 = scalar_select %p208, %s207, 5
      %s210 = smul.addr %s209, 4
      %s211 = scalar_lea.vmem %s1, %s210
      %s212 = smul.u32 6, %s19
      %s213 = smul.u32 32, %s18
      %p214 = scmp.lt.s32.totalorder %s213, 63
      %s215 = scalar_select %p214, %s213, 63
      %s216 = smul.addr %s215, 4
      %s217 = scalar_lea.vmem %s3, %s216
      %s218 = smul.u32 32, %s18
      %p220 = scmp.eq.s32.totalorder %s19, 0
      // Predicated region
      $region33: #{discriminator_forward.2} parent=31 // pred_check
        %p221 = pneg %p220
      $region34: #{discriminator_forward.2} parent=31 // pred_check_branch
        %223 = sbr.rel (%p221) target = $region36
      $region35: #{discriminator_forward.2} parent=31 // pred_region
        %224 = vst [vmem:[#allocation2] sm:$0xff] 0.0
        %225 = vst [vmem:[#allocation2 + $0x8] sm:$0xff] 0.0
        %226 = vst [vmem:[#allocation2 + $0x10] sm:$0xff] 0.0
        %227 = vst [vmem:[#allocation2 + $0x18] sm:$0xff] 0.0
        %228 = vst [vmem:[#allocation2 + $0x20] sm:$0xff] 0.0
        %229 = vst [vmem:[#allocation2 + $0x28] sm:$0xff] 0.0
        %230 = vst [vmem:[#allocation2 + $0x30] sm:$0xff] 0.0
        %231 = vst [vmem:[#allocation2 + $0x38] sm:$0xff] 0.0
        %232 = vst [vmem:[#allocation2 + $0x40] sm:$0xff] 0.0
        %233 = vst [vmem:[#allocation2 + $0x48] sm:$0xff] 0.0
        %234 = vst [vmem:[#allocation2 + $0x50] sm:$0xff] 0.0
        %235 = vst [vmem:[#allocation2 + $0x58] sm:$0xff] 0.0
        %236 = vst [vmem:[#allocation2 + $0x60] sm:$0xff] 0.0
        %237 = vst [vmem:[#allocation2 + $0x68] sm:$0xff] 0.0
        %238 = vst [vmem:[#allocation2 + $0x70] sm:$0xff] 0.0
        %239 = vst [vmem:[#allocation2 + $0x78] sm:$0xff] 0.0
        %240 = vst [vmem:[#allocation2 + $0x80] sm:$0xff] 0.0
        %241 = vst [vmem:[#allocation2 + $0x88] sm:$0xff] 0.0
        %242 = vst [vmem:[#allocation2 + $0x90] sm:$0xff] 0.0
        %243 = vst [vmem:[#allocation2 + $0x98] sm:$0xff] 0.0
        %244 = vst [vmem:[#allocation2 + $0xa0] sm:$0xff] 0.0
        %245 = vst [vmem:[#allocation2 + $0xa8] sm:$0xff] 0.0
        %246 = vst [vmem:[#allocation2 + $0xb0] sm:$0xff] 0.0
        %247 = vst [vmem:[#allocation2 + $0xb8] sm:$0xff] 0.0
        %248 = vst [vmem:[#allocation2 + $0xc0] sm:$0xff] 0.0
        %249 = vst [vmem:[#allocation2 + $0xc8] sm:$0xff] 0.0
        %250 = vst [vmem:[#allocation2 + $0xd0] sm:$0xff] 0.0
        %251 = vst [vmem:[#allocation2 + $0xd8] sm:$0xff] 0.0
        %252 = vst [vmem:[#allocation2 + $0xe0] sm:$0xff] 0.0
        %253 = vst [vmem:[#allocation2 + $0xe8] sm:$0xff] 0.0
        %254 = vst [vmem:[#allocation2 + $0xf0] sm:$0xff] 0.0
        %255 = vst [vmem:[#allocation2 + $0xf8] sm:$0xff] 0.0
      $region36: #{discriminator_forward.2} parent=31 // pred_fallthru
        _
      %v256 = vld [vmem:[#allocation2] sm:$0xff]
      %v257 = vld [vmem:[#allocation2 + $0x8] sm:$0xff]
      %v258 = vld [vmem:[#allocation2 + $0x10] sm:$0xff]
      %v259 = vld [vmem:[#allocation2 + $0x18] sm:$0xff]
      %v260 = vld [vmem:[#allocation2 + $0x20] sm:$0xff]
      %v261 = vld [vmem:[#allocation2 + $0x28] sm:$0xff]
      %v262 = vld [vmem:[#allocation2 + $0x30] sm:$0xff]
      %v263 = vld [vmem:[#allocation2 + $0x38] sm:$0xff]
      %v264 = vld [vmem:[#allocation2 + $0x40] sm:$0xff]
      %v265 = vld [vmem:[#allocation2 + $0x48] sm:$0xff]
      %v266 = vld [vmem:[#allocation2 + $0x50] sm:$0xff]
      %v267 = vld [vmem:[#allocation2 + $0x58] sm:$0xff]
      %v268 = vld [vmem:[#allocation2 + $0x60] sm:$0xff]
      %v269 = vld [vmem:[#allocation2 + $0x68] sm:$0xff]
      %v270 = vld [vmem:[#allocation2 + $0x70] sm:$0xff]
      %v271 = vld [vmem:[#allocation2 + $0x78] sm:$0xff]
      %v272 = vld [vmem:[#allocation2 + $0x80] sm:$0xff]
      %v273 = vld [vmem:[#allocation2 + $0x88] sm:$0xff]
      %v274 = vld [vmem:[#allocation2 + $0x90] sm:$0xff]
      %v275 = vld [vmem:[#allocation2 + $0x98] sm:$0xff]
      %v276 = vld [vmem:[#allocation2 + $0xa0] sm:$0xff]
      %v277 = vld [vmem:[#allocation2 + $0xa8] sm:$0xff]
      %v278 = vld [vmem:[#allocation2 + $0xb0] sm:$0xff]
      %v279 = vld [vmem:[#allocation2 + $0xb8] sm:$0xff]
      %v280 = vld [vmem:[#allocation2 + $0xc0] sm:$0xff]
      %v281 = vld [vmem:[#allocation2 + $0xc8] sm:$0xff]
      %v282 = vld [vmem:[#allocation2 + $0xd0] sm:$0xff]
      %v283 = vld [vmem:[#allocation2 + $0xd8] sm:$0xff]
      %v284 = vld [vmem:[#allocation2 + $0xe0] sm:$0xff]
      %v285 = vld [vmem:[#allocation2 + $0xe8] sm:$0xff]
      %v286 = vld [vmem:[#allocation2 + $0xf0] sm:$0xff]
      %v287 = vld [vmem:[#allocation2 + $0xf8] sm:$0xff]
      %v288 = vld [vmem:[%s205] sm:$0xf]
      %v289 = vld [vmem:[%s205 + $0x4] sm:$0xf]
      %v290 = vld [vmem:[%s205 + $0x8] sm:$0xf]
      %v291 = vld [vmem:[%s205 + $0xc] sm:$0xf]
      %v292 = vld [vmem:[%s205 + $0x10] sm:$0xf]
      %v293 = vld [vmem:[%s205 + $0x14] sm:$0xf]
      %v294 = vld [vmem:[%s205 + $0x18] sm:$0xf]
      %v295 = vld [vmem:[%s205 + $0x1c] sm:$0xf]
      %v296 = vld [vmem:[%s205 + $0x20] sm:$0xf]
      %v297 = vld [vmem:[%s205 + $0x24] sm:$0xf]
      %v298 = vld [vmem:[%s205 + $0x28] sm:$0xf]
      %v299 = vld [vmem:[%s205 + $0x2c] sm:$0xf]
      %v300 = vld [vmem:[%s205 + $0x30] sm:$0xf]
      %v301 = vld [vmem:[%s205 + $0x34] sm:$0xf]
      %v302 = vld [vmem:[%s205 + $0x38] sm:$0xf]
      %v303 = vld [vmem:[%s205 + $0x3c] sm:$0xf]
      %v304 = vld [vmem:[%s205 + $0x40] sm:$0xf]
      %v305 = vld [vmem:[%s205 + $0x44] sm:$0xf]
      %v306 = vld [vmem:[%s205 + $0x48] sm:$0xf]
      %v307 = vld [vmem:[%s205 + $0x4c] sm:$0xf]
      %v308 = vld [vmem:[%s205 + $0x50] sm:$0xf]
      %v309 = vld [vmem:[%s205 + $0x54] sm:$0xf]
      %v310 = vld [vmem:[%s205 + $0x58] sm:$0xf]
      %v311 = vld [vmem:[%s205 + $0x5c] sm:$0xf]
      %v312 = vld [vmem:[%s205 + $0x60] sm:$0xf]
      %v313 = vld [vmem:[%s205 + $0x64] sm:$0xf]
      %v314 = vld [vmem:[%s205 + $0x68] sm:$0xf]
      %v315 = vld [vmem:[%s205 + $0x6c] sm:$0xf]
      %v316 = vld [vmem:[%s205 + $0x70] sm:$0xf]
      %v317 = vld [vmem:[%s205 + $0x74] sm:$0xf]
      %v318 = vld [vmem:[%s205 + $0x78] sm:$0xf]
      %v319 = vld [vmem:[%s205 + $0x7c] sm:$0xf]
      %v320 = vld [vmem:[%s211] sm:$0xf]
      %v321 = vld [vmem:[%s211 + $0x4] sm:$0xf]
      %v322 = vld [vmem:[%s211 + $0x8] sm:$0xf]
      %v323 = vld [vmem:[%s211 + $0xc] sm:$0xf]
      %v324 = vld [vmem:[%s211 + $0x10] sm:$0xf]
      %v325 = vld [vmem:[%s211 + $0x14] sm:$0xf]
      %v358 = vunpack.c.l.b16 %v288
      %v359 = vunpack.c.l.b16 %v289
      %v360 = vunpack.c.l.b16 %v290
      %v361 = vunpack.c.l.b16 %v291
      %v362 = vunpack.c.l.b16 %v292
      %v363 = vunpack.c.l.b16 %v293
      %v364 = vunpack.c.l.b16 %v294
      %v365 = vunpack.c.l.b16 %v295
      %v366 = vunpack.c.l.b16 %v296
      %v367 = vunpack.c.l.b16 %v297
      %v368 = vunpack.c.l.b16 %v298
      %v369 = vunpack.c.l.b16 %v299
      %v370 = vunpack.c.l.b16 %v300
      %v371 = vunpack.c.l.b16 %v301
      %v372 = vunpack.c.l.b16 %v302
      %v373 = vunpack.c.l.b16 %v303
      %v374 = vunpack.c.l.b16 %v304
      %v375 = vunpack.c.l.b16 %v305
      %v376 = vunpack.c.l.b16 %v306
      %v377 = vunpack.c.l.b16 %v307
      %v378 = vunpack.c.l.b16 %v308
      %v379 = vunpack.c.l.b16 %v309
      %v380 = vunpack.c.l.b16 %v310
      %v381 = vunpack.c.l.b16 %v311
      %v382 = vunpack.c.l.b16 %v312
      %v383 = vunpack.c.l.b16 %v313
      %v384 = vunpack.c.l.b16 %v314
      %v385 = vunpack.c.l.b16 %v315
      %v386 = vunpack.c.l.b16 %v316
      %v387 = vunpack.c.l.b16 %v317
      %v388 = vunpack.c.l.b16 %v318
      %v389 = vunpack.c.l.b16 %v319
      %v390 = vpack.c.b16 %v359, %v358
      %v391 = vpack.c.b16 %v361, %v360
      %v392 = vpack.c.b16 %v363, %v362
      %v393 = vpack.c.b16 %v365, %v364
      %v394 = vpack.c.b16 %v367, %v366
      %v395 = vpack.c.b16 %v369, %v368
      %v396 = vpack.c.b16 %v371, %v370
      %v397 = vpack.c.b16 %v373, %v372
      %v398 = vpack.c.b16 %v375, %v374
      %v399 = vpack.c.b16 %v377, %v376
      %v400 = vpack.c.b16 %v379, %v378
      %v401 = vpack.c.b16 %v381, %v380
      %v402 = vpack.c.b16 %v383, %v382
      %v403 = vpack.c.b16 %v385, %v384
      %v404 = vpack.c.b16 %v387, %v386
      %v405 = vpack.c.b16 %v389, %v388
      %v412 = vunpack.c.l.b16 %v320
      %v413 = vunpack.c.l.b16 %v321
      %v414 = vunpack.c.l.b16 %v322
      %v415 = vunpack.c.l.b16 %v323
      %v416 = vunpack.c.l.b16 %v324
      %v417 = vunpack.c.l.b16 %v325
      %v418 = vpack.c.b16 %v413, %v412
      %v419 = vpack.c.b16 %v415, %v414
      %v420 = vpack.c.b16 %v417, %v416
      %vm424 = vcmask 392192
      %v426 = vsel %vm424, %v390, 0
      %v429 = vsel %vm424, %v391, 0
      %v432 = vsel %vm424, %v392, 0
      %v435 = vsel %vm424, %v393, 0
      %v438 = vsel %vm424, %v394, 0
      %v441 = vsel %vm424, %v395, 0
      %v444 = vsel %vm424, %v396, 0
      %v447 = vsel %vm424, %v397, 0
      %v450 = vsel %vm424, %v398, 0
      %v453 = vsel %vm424, %v399, 0
      %v456 = vsel %vm424, %v400, 0
      %v459 = vsel %vm424, %v401, 0
      %v462 = vsel %vm424, %v402, 0
      %v465 = vsel %vm424, %v403, 0
      %v468 = vsel %vm424, %v404, 0
      %v471 = vsel %vm424, %v405, 0
      %473 = vmatpush.bf16.msra.mxu0 0
      %474 = vmatpush.bf16.msra.mxu0 0
      %475 = vmatpush.bf16.msra.mxu0 0
      %476 = vmatpush.bf16.msra.mxu0 0
      %477 = vmatpush.bf16.msra.mxu0 0
      %478 = vmatpush.bf16.msra.mxu0 %v420
      %479 = vmatpush.bf16.msra.mxu0 %v419
      %480 = vmatpush.bf16.msra.mxu0 %v418
      %481 = vmatmul.bf16.gmra.mxu0 %v426
      %v482 = vpop.f32.mrf.mxu0
      %v483 = vadd.f32 0.0, %v482
      %v484 = vpop.f32.mrf.mxu0
      %v485 = vadd.f32 0.0, %v484
      %486 = vmatmul.bf16.gmra.mxu0 %v429
      %v487 = vpop.f32.mrf.mxu0
      %v488 = vadd.f32 0.0, %v487
      %v489 = vpop.f32.mrf.mxu0
      %v490 = vadd.f32 0.0, %v489
      %491 = vmatmul.bf16.gmra.mxu0 %v432
      %v492 = vpop.f32.mrf.mxu0
      %v493 = vadd.f32 0.0, %v492
      %v494 = vpop.f32.mrf.mxu0
      %v495 = vadd.f32 0.0, %v494
      %496 = vmatmul.bf16.gmra.mxu0 %v435
      %v497 = vpop.f32.mrf.mxu0
      %v498 = vadd.f32 0.0, %v497
      %v499 = vpop.f32.mrf.mxu0
      %v500 = vadd.f32 0.0, %v499
      %501 = vmatmul.bf16.gmra.mxu0 %v438
      %v502 = vpop.f32.mrf.mxu0
      %v503 = vadd.f32 0.0, %v502
      %v504 = vpop.f32.mrf.mxu0
      %v505 = vadd.f32 0.0, %v504
      %506 = vmatmul.bf16.gmra.mxu0 %v441
      %v507 = vpop.f32.mrf.mxu0
      %v508 = vadd.f32 0.0, %v507
      %v509 = vpop.f32.mrf.mxu0
      %v510 = vadd.f32 0.0, %v509
      %511 = vmatmul.bf16.gmra.mxu0 %v444
      %v512 = vpop.f32.mrf.mxu0
      %v513 = vadd.f32 0.0, %v512
      %v514 = vpop.f32.mrf.mxu0
      %v515 = vadd.f32 0.0, %v514
      %516 = vmatmul.bf16.gmra.mxu0 %v447
      %v517 = vpop.f32.mrf.mxu0
      %v518 = vadd.f32 0.0, %v517
      %v519 = vpop.f32.mrf.mxu0
      %v520 = vadd.f32 0.0, %v519
      %521 = vmatmul.bf16.gmra.mxu0 %v450
      %v522 = vpop.f32.mrf.mxu0
      %v523 = vadd.f32 0.0, %v522
      %v524 = vpop.f32.mrf.mxu0
      %v525 = vadd.f32 0.0, %v524
      %526 = vmatmul.bf16.gmra.mxu0 %v453
      %v527 = vpop.f32.mrf.mxu0
      %v528 = vadd.f32 0.0, %v527
      %v529 = vpop.f32.mrf.mxu0
      %v530 = vadd.f32 0.0, %v529
      %531 = vmatmul.bf16.gmra.mxu0 %v456
      %v532 = vpop.f32.mrf.mxu0
      %v533 = vadd.f32 0.0, %v532
      %v534 = vpop.f32.mrf.mxu0
      %v535 = vadd.f32 0.0, %v534
      %536 = vmatmul.bf16.gmra.mxu0 %v459
      %v537 = vpop.f32.mrf.mxu0
      %v538 = vadd.f32 0.0, %v537
      %v539 = vpop.f32.mrf.mxu0
      %v540 = vadd.f32 0.0, %v539
      %541 = vmatmul.bf16.gmra.mxu0 %v462
      %v542 = vpop.f32.mrf.mxu0
      %v543 = vadd.f32 0.0, %v542
      %v544 = vpop.f32.mrf.mxu0
      %v545 = vadd.f32 0.0, %v544
      %546 = vmatmul.bf16.gmra.mxu0 %v465
      %v547 = vpop.f32.mrf.mxu0
      %v548 = vadd.f32 0.0, %v547
      %v549 = vpop.f32.mrf.mxu0
      %v550 = vadd.f32 0.0, %v549
      %551 = vmatmul.bf16.gmra.mxu0 %v468
      %v552 = vpop.f32.mrf.mxu0
      %v553 = vadd.f32 0.0, %v552
      %v554 = vpop.f32.mrf.mxu0
      %v555 = vadd.f32 0.0, %v554
      %556 = vmatmul.bf16.gmra.mxu0 %v471
      %v557 = vpop.f32.mrf.mxu0
      %v558 = vadd.f32 0.0, %v557
      %v559 = vpop.f32.mrf.mxu0
      %v560 = vadd.f32 0.0, %v559
      %561 = vdwg.mxu0
      %v562 = vadd.f32 %v256, %v483
      %v563 = vadd.f32 %v257, %v485
      %v564 = vadd.f32 %v258, %v488
      %v565 = vadd.f32 %v259, %v490
      %v566 = vadd.f32 %v260, %v493
      %v567 = vadd.f32 %v261, %v495
      %v568 = vadd.f32 %v262, %v498
      %v569 = vadd.f32 %v263, %v500
      %v570 = vadd.f32 %v264, %v503
      %v571 = vadd.f32 %v265, %v505
      %v572 = vadd.f32 %v266, %v508
      %v573 = vadd.f32 %v267, %v510
      %v574 = vadd.f32 %v268, %v513
      %v575 = vadd.f32 %v269, %v515
      %v576 = vadd.f32 %v270, %v518
      %v577 = vadd.f32 %v271, %v520
      %v578 = vadd.f32 %v272, %v523
      %v579 = vadd.f32 %v273, %v525
      %v580 = vadd.f32 %v274, %v528
      %v581 = vadd.f32 %v275, %v530
      %v582 = vadd.f32 %v276, %v533
      %v583 = vadd.f32 %v277, %v535
      %v584 = vadd.f32 %v278, %v538
      %v585 = vadd.f32 %v279, %v540
      %v586 = vadd.f32 %v280, %v543
      %v587 = vadd.f32 %v281, %v545
      %v588 = vadd.f32 %v282, %v548
      %v589 = vadd.f32 %v283, %v550
      %v590 = vadd.f32 %v284, %v553
      %v591 = vadd.f32 %v285, %v555
      %v592 = vadd.f32 %v286, %v558
      %v593 = vadd.f32 %v287, %v560
      %594 = vst [vmem:[#allocation2] sm:$0xff] %v562
      %595 = vst [vmem:[#allocation2 + $0x8] sm:$0xff] %v563
      %596 = vst [vmem:[#allocation2 + $0x10] sm:$0xff] %v564
      %597 = vst [vmem:[#allocation2 + $0x18] sm:$0xff] %v565
      %598 = vst [vmem:[#allocation2 + $0x20] sm:$0xff] %v566
      %599 = vst [vmem:[#allocation2 + $0x28] sm:$0xff] %v567
      %600 = vst [vmem:[#allocation2 + $0x30] sm:$0xff] %v568
      %601 = vst [vmem:[#allocation2 + $0x38] sm:$0xff] %v569
      %602 = vst [vmem:[#allocation2 + $0x40] sm:$0xff] %v570
      %603 = vst [vmem:[#allocation2 + $0x48] sm:$0xff] %v571
      %604 = vst [vmem:[#allocation2 + $0x50] sm:$0xff] %v572
      %605 = vst [vmem:[#allocation2 + $0x58] sm:$0xff] %v573
      %606 = vst [vmem:[#allocation2 + $0x60] sm:$0xff] %v574
      %607 = vst [vmem:[#allocation2 + $0x68] sm:$0xff] %v575
      %608 = vst [vmem:[#allocation2 + $0x70] sm:$0xff] %v576
      %609 = vst [vmem:[#allocation2 + $0x78] sm:$0xff] %v577
      %610 = vst [vmem:[#allocation2 + $0x80] sm:$0xff] %v578
      %611 = vst [vmem:[#allocation2 + $0x88] sm:$0xff] %v579
      %612 = vst [vmem:[#allocation2 + $0x90] sm:$0xff] %v580
      %613 = vst [vmem:[#allocation2 + $0x98] sm:$0xff] %v581
      %614 = vst [vmem:[#allocation2 + $0xa0] sm:$0xff] %v582
      %615 = vst [vmem:[#allocation2 + $0xa8] sm:$0xff] %v583
      %616 = vst [vmem:[#allocation2 + $0xb0] sm:$0xff] %v584
      %617 = vst [vmem:[#allocation2 + $0xb8] sm:$0xff] %v585
      %618 = vst [vmem:[#allocation2 + $0xc0] sm:$0xff] %v586
      %619 = vst [vmem:[#allocation2 + $0xc8] sm:$0xff] %v587
      %620 = vst [vmem:[#allocation2 + $0xd0] sm:$0xff] %v588
      %621 = vst [vmem:[#allocation2 + $0xd8] sm:$0xff] %v589
      %622 = vst [vmem:[#allocation2 + $0xe0] sm:$0xff] %v590
      %623 = vst [vmem:[#allocation2 + $0xe8] sm:$0xff] %v591
      %624 = vst [vmem:[#allocation2 + $0xf0] sm:$0xff] %v592
      %625 = vst [vmem:[#allocation2 + $0xf8] sm:$0xff] %v593
      // Predicated region
      $region37: #{discriminator_forward.2} parent=31 // pred_check
        %p626 = pneg %p220
      $region38: #{discriminator_forward.2} parent=31 // pred_check_branch
        %628 = sbr.rel (%p626) target = $region40
      $region39: #{discriminator_forward.2} parent=31 // pred_region
        %v629 = vld [vmem:[#allocation2] sm:$0xff]
        %v630 = vld [vmem:[#allocation2 + $0x8] sm:$0xff]
        %v631 = vld [vmem:[#allocation2 + $0x10] sm:$0xff]
        %v632 = vld [vmem:[#allocation2 + $0x18] sm:$0xff]
        %v633 = vld [vmem:[#allocation2 + $0x20] sm:$0xff]
        %v634 = vld [vmem:[#allocation2 + $0x28] sm:$0xff]
        %v635 = vld [vmem:[#allocation2 + $0x30] sm:$0xff]
        %v636 = vld [vmem:[#allocation2 + $0x38] sm:$0xff]
        %v637 = vld [vmem:[#allocation2 + $0x40] sm:$0xff]
        %v638 = vld [vmem:[#allocation2 + $0x48] sm:$0xff]
        %v639 = vld [vmem:[#allocation2 + $0x50] sm:$0xff]
        %v640 = vld [vmem:[#allocation2 + $0x58] sm:$0xff]
        %v641 = vld [vmem:[#allocation2 + $0x60] sm:$0xff]
        %v642 = vld [vmem:[#allocation2 + $0x68] sm:$0xff]
        %v643 = vld [vmem:[#allocation2 + $0x70] sm:$0xff]
        %v644 = vld [vmem:[#allocation2 + $0x78] sm:$0xff]
        %v645 = vld [vmem:[#allocation2 + $0x80] sm:$0xff]
        %v646 = vld [vmem:[#allocation2 + $0x88] sm:$0xff]
        %v647 = vld [vmem:[#allocation2 + $0x90] sm:$0xff]
        %v648 = vld [vmem:[#allocation2 + $0x98] sm:$0xff]
        %v649 = vld [vmem:[#allocation2 + $0xa0] sm:$0xff]
        %v650 = vld [vmem:[#allocation2 + $0xa8] sm:$0xff]
        %v651 = vld [vmem:[#allocation2 + $0xb0] sm:$0xff]
        %v652 = vld [vmem:[#allocation2 + $0xb8] sm:$0xff]
        %v653 = vld [vmem:[#allocation2 + $0xc0] sm:$0xff]
        %v654 = vld [vmem:[#allocation2 + $0xc8] sm:$0xff]
        %v655 = vld [vmem:[#allocation2 + $0xd0] sm:$0xff]
        %v656 = vld [vmem:[#allocation2 + $0xd8] sm:$0xff]
        %v657 = vld [vmem:[#allocation2 + $0xe0] sm:$0xff]
        %v658 = vld [vmem:[#allocation2 + $0xe8] sm:$0xff]
        %v659 = vld [vmem:[#allocation2 + $0xf0] sm:$0xff]
        %v660 = vld [vmem:[#allocation2 + $0xf8] sm:$0xff]
        %v661 = vld [vmem:[%s2] sm:$0x1]
        %v663 = vperm.slane %v661, 0
        %v665 = vadd.f32 %v629, %v663
        %v666 = vadd.f32 %v630, %v663
        %v667 = vadd.f32 %v631, %v663
        %v668 = vadd.f32 %v632, %v663
        %v669 = vadd.f32 %v633, %v663
        %v670 = vadd.f32 %v634, %v663
        %v671 = vadd.f32 %v635, %v663
        %v672 = vadd.f32 %v636, %v663
        %v673 = vadd.f32 %v637, %v663
        %v674 = vadd.f32 %v638, %v663
        %v675 = vadd.f32 %v639, %v663
        %v676 = vadd.f32 %v640, %v663
        %v677 = vadd.f32 %v641, %v663
        %v678 = vadd.f32 %v642, %v663
        %v679 = vadd.f32 %v643, %v663
        %v680 = vadd.f32 %v644, %v663
        %v681 = vadd.f32 %v645, %v663
        %v682 = vadd.f32 %v646, %v663
        %v683 = vadd.f32 %v647, %v663
        %v684 = vadd.f32 %v648, %v663
        %v685 = vadd.f32 %v649, %v663
        %v686 = vadd.f32 %v650, %v663
        %v687 = vadd.f32 %v651, %v663
        %v688 = vadd.f32 %v652, %v663
        %v689 = vadd.f32 %v653, %v663
        %v690 = vadd.f32 %v654, %v663
        %v691 = vadd.f32 %v655, %v663
        %v692 = vadd.f32 %v656, %v663
        %v693 = vadd.f32 %v657, %v663
        %v694 = vadd.f32 %v658, %v663
        %v695 = vadd.f32 %v659, %v663
        %v696 = vadd.f32 %v660, %v663
        %v697 = vmul.f32 %v665, 0.01
        %v698 = vmul.f32 %v666, 0.01
        %v699 = vmul.f32 %v667, 0.01
        %v700 = vmul.f32 %v668, 0.01
        %v701 = vmul.f32 %v669, 0.01
        %v702 = vmul.f32 %v670, 0.01
        %v703 = vmul.f32 %v671, 0.01
        %v704 = vmul.f32 %v672, 0.01
        %v705 = vmul.f32 %v673, 0.01
        %v706 = vmul.f32 %v674, 0.01
        %v707 = vmul.f32 %v675, 0.01
        %v708 = vmul.f32 %v676, 0.01
        %v709 = vmul.f32 %v677, 0.01
        %v710 = vmul.f32 %v678, 0.01
        %v711 = vmul.f32 %v679, 0.01
        %v712 = vmul.f32 %v680, 0.01
        %v713 = vmul.f32 %v681, 0.01
        %v714 = vmul.f32 %v682, 0.01
        %v715 = vmul.f32 %v683, 0.01
        %v716 = vmul.f32 %v684, 0.01
        %v717 = vmul.f32 %v685, 0.01
        %v718 = vmul.f32 %v686, 0.01
        %v719 = vmul.f32 %v687, 0.01
        %v720 = vmul.f32 %v688, 0.01
        %v721 = vmul.f32 %v689, 0.01
        %v722 = vmul.f32 %v690, 0.01
        %v723 = vmul.f32 %v691, 0.01
        %v724 = vmul.f32 %v692, 0.01
        %v725 = vmul.f32 %v693, 0.01
        %v726 = vmul.f32 %v694, 0.01
        %v727 = vmul.f32 %v695, 0.01
        %v728 = vmul.f32 %v696, 0.01
        %v729 = vmax.f32 %v665, %v697
        %v730 = vmax.f32 %v666, %v698
        %v731 = vmax.f32 %v667, %v699
        %v732 = vmax.f32 %v668, %v700
        %v733 = vmax.f32 %v669, %v701
        %v734 = vmax.f32 %v670, %v702
        %v735 = vmax.f32 %v671, %v703
        %v736 = vmax.f32 %v672, %v704
        %v737 = vmax.f32 %v673, %v705
        %v738 = vmax.f32 %v674, %v706
        %v739 = vmax.f32 %v675, %v707
        %v740 = vmax.f32 %v676, %v708
        %v741 = vmax.f32 %v677, %v709
        %v742 = vmax.f32 %v678, %v710
        %v743 = vmax.f32 %v679, %v711
        %v744 = vmax.f32 %v680, %v712
        %v745 = vmax.f32 %v681, %v713
        %v746 = vmax.f32 %v682, %v714
        %v747 = vmax.f32 %v683, %v715
        %v748 = vmax.f32 %v684, %v716
        %v749 = vmax.f32 %v685, %v717
        %v750 = vmax.f32 %v686, %v718
        %v751 = vmax.f32 %v687, %v719
        %v752 = vmax.f32 %v688, %v720
        %v753 = vmax.f32 %v689, %v721
        %v754 = vmax.f32 %v690, %v722
        %v755 = vmax.f32 %v691, %v723
        %v756 = vmax.f32 %v692, %v724
        %v757 = vmax.f32 %v693, %v725
        %v758 = vmax.f32 %v694, %v726
        %v759 = vmax.f32 %v695, %v727
        %v760 = vmax.f32 %v696, %v728
        %v761 = vpack.c.bf16 %v729, %v729
        %v762 = vpack.c.bf16 %v730, %v730
        %v763 = vpack.c.bf16 %v731, %v731
        %v764 = vpack.c.bf16 %v732, %v732
        %v765 = vpack.c.bf16 %v733, %v733
        %v766 = vpack.c.bf16 %v734, %v734
        %v767 = vpack.c.bf16 %v735, %v735
        %v768 = vpack.c.bf16 %v736, %v736
        %v769 = vpack.c.bf16 %v737, %v737
        %v770 = vpack.c.bf16 %v738, %v738
        %v771 = vpack.c.bf16 %v739, %v739
        %v772 = vpack.c.bf16 %v740, %v740
        %v773 = vpack.c.bf16 %v741, %v741
        %v774 = vpack.c.bf16 %v742, %v742
        %v775 = vpack.c.bf16 %v743, %v743
        %v776 = vpack.c.bf16 %v744, %v744
        %v777 = vpack.c.bf16 %v745, %v745
        %v778 = vpack.c.bf16 %v746, %v746
        %v779 = vpack.c.bf16 %v747, %v747
        %v780 = vpack.c.bf16 %v748, %v748
        %v781 = vpack.c.bf16 %v749, %v749
        %v782 = vpack.c.bf16 %v750, %v750
        %v783 = vpack.c.bf16 %v751, %v751
        %v784 = vpack.c.bf16 %v752, %v752
        %v785 = vpack.c.bf16 %v753, %v753
        %v786 = vpack.c.bf16 %v754, %v754
        %v787 = vpack.c.bf16 %v755, %v755
        %v788 = vpack.c.bf16 %v756, %v756
        %v789 = vpack.c.bf16 %v757, %v757
        %v790 = vpack.c.bf16 %v758, %v758
        %v791 = vpack.c.bf16 %v759, %v759
        %v792 = vpack.c.bf16 %v760, %v760
        %793 = vst [vmem:[%s217] sm:$0xf] %v761
        %794 = vst [vmem:[%s217 + $0x4] sm:$0xf] %v762
        %795 = vst [vmem:[%s217 + $0x8] sm:$0xf] %v763
        %796 = vst [vmem:[%s217 + $0xc] sm:$0xf] %v764
        %797 = vst [vmem:[%s217 + $0x10] sm:$0xf] %v765
        %798 = vst [vmem:[%s217 + $0x14] sm:$0xf] %v766
        %799 = vst [vmem:[%s217 + $0x18] sm:$0xf] %v767
        %800 = vst [vmem:[%s217 + $0x1c] sm:$0xf] %v768
        %801 = vst [vmem:[%s217 + $0x20] sm:$0xf] %v769
        %802 = vst [vmem:[%s217 + $0x24] sm:$0xf] %v770
        %803 = vst [vmem:[%s217 + $0x28] sm:$0xf] %v771
        %804 = vst [vmem:[%s217 + $0x2c] sm:$0xf] %v772
        %805 = vst [vmem:[%s217 + $0x30] sm:$0xf] %v773
        %806 = vst [vmem:[%s217 + $0x34] sm:$0xf] %v774
        %807 = vst [vmem:[%s217 + $0x38] sm:$0xf] %v775
        %808 = vst [vmem:[%s217 + $0x3c] sm:$0xf] %v776
        %809 = vst [vmem:[%s217 + $0x40] sm:$0xf] %v777
        %810 = vst [vmem:[%s217 + $0x44] sm:$0xf] %v778
        %811 = vst [vmem:[%s217 + $0x48] sm:$0xf] %v779
        %812 = vst [vmem:[%s217 + $0x4c] sm:$0xf] %v780
        %813 = vst [vmem:[%s217 + $0x50] sm:$0xf] %v781
        %814 = vst [vmem:[%s217 + $0x54] sm:$0xf] %v782
        %815 = vst [vmem:[%s217 + $0x58] sm:$0xf] %v783
        %816 = vst [vmem:[%s217 + $0x5c] sm:$0xf] %v784
        %817 = vst [vmem:[%s217 + $0x60] sm:$0xf] %v785
        %818 = vst [vmem:[%s217 + $0x64] sm:$0xf] %v786
        %819 = vst [vmem:[%s217 + $0x68] sm:$0xf] %v787
        %820 = vst [vmem:[%s217 + $0x6c] sm:$0xf] %v788
        %821 = vst [vmem:[%s217 + $0x70] sm:$0xf] %v789
        %822 = vst [vmem:[%s217 + $0x74] sm:$0xf] %v790
        %823 = vst [vmem:[%s217 + $0x78] sm:$0xf] %v791
        %824 = vst [vmem:[%s217 + $0x7c] sm:$0xf] %v792
      $region40: #{discriminator_forward.2} parent=31 // pred_fallthru
        _
      %s825 = smul.u32 32, %s18
      %p826 = scmp.lt.s32.totalorder %s825, 63
      %s827 = scalar_select %p826, %s825, 63
      %s828 = smul.addr %s827, 4
      %s829 = scalar_lea.vmem %s3, %s828
      // Predicated region
      $region41: #{discriminator_forward.2} parent=31 // pred_check
        %p830 = pneg %p119
      $region42: #{discriminator_forward.2} parent=31 // pred_check_branch
        %832 = sbr.rel (%p830) target = $region44
      $region43: #{discriminator_forward.2} parent=31 // pred_region
        %s833 = smul.u32 32, %s18
      $region44: #{discriminator_forward.2} parent=31 // pred_fallthru
        _
    $region32: #{discriminator_forward.2} parent=5 // pred_fallthru
      _
    %p834 = scmp.le.s32.totalorder 2, %s9
    // Predicated region
    $region45: #{discriminator_forward.2} parent=5 // pred_check
      %p835 = pneg %p834
    $region46: #{discriminator_forward.2} parent=5 // pred_check_branch
      %837 = sbr.rel (%p835) target = $region48
    $region47: #{discriminator_forward.2} parent=5 // pred_region
      %s838 = ssub.s32 %s9, 2
      // Predicated region
      $region49: #{discriminator_forward.2} parent=47 // pred_check
        %p839 = pneg %p125
      $region50: #{discriminator_forward.2} parent=47 // pred_check_branch
        %841 = sbr.rel (%p839) target = $region52
      $region51: #{discriminator_forward.2} parent=47 // pred_region
        %s842 = smul.u32 32, %s20
        %p843 = scmp.lt.s32.totalorder %s842, 63
        %s844 = scalar_select %p843, %s842, 63
        %s845 = smul.addr %s844, 4
        %s846 = scalar_lea.vmem %s3, %s845
      $region52: #{discriminator_forward.2} parent=47 // pred_fallthru
        _
    $region48: #{discriminator_forward.2} parent=5 // pred_fallthru
      _
  $region6: #{discriminator_forward.2} parent=0 // loop_footer
    %s13 = sadd.s32 1, %s9
  $region7: #{discriminator_forward.2} parent=0 // loop_footer_branch
    %8 = sbr.rel target = $region3
  $region8: #{discriminator_forward.2} parent=0 // loop_exit
    _

// kernel: discriminator_forward.3
$region0: #{discriminator_forward.3}
  #allocation0 [shape = 'u32[]', space=smem, size = 0x4, offset = 0x4, fixed_abs, tag = 'smem constant byte address 0x4 - core index']
  #allocation1 [shape = 'u32[72,128]{1,0:T(1,128)}', space=vmem, size = 0x9000, scoped, tag = 'internal scratch']
  #allocation2 [shape = 'f32[64,128]{1,0:T(8,128)}', space=vmem, size = 0x8000, scoped, tag = 'scratch operand']
  %s0 = inlined_call_operand.vmem [shape: bf16[128,128], index: 0, kind: input, shape index: {}]
  %s1 = inlined_call_operand.vmem [shape: bf16[128,128], index: 1, kind: input, shape index: {}]
  %s2 = inlined_call_operand.vmem [shape: f32[1,128], index: 2, kind: input, shape index: {}]
  %s3 = inlined_call_operand.vmem [shape: bf16[128,128], index: 3, kind: output, shape index: {}]
  %s4 = sld [smem:[#allocation0]]
  $region53: #{discriminator_forward.3} parent=0
    _
  %s6 = ssub.s32 1, %s4
  %s7 = scalar_select 0, %s6, %s4
  loop: start=0, step=1, limit=4
  $region2: #{discriminator_forward.3} parent=0 // loop_pre_header
    _
  $region3: #{discriminator_forward.3} parent=0 // loop_header
    %s9 = sphi 0, %s13
    %p10 = scmp.ge.s32.totalorder %s9, 4
    %s16 = sphi 0, %s28
    %s17 = sphi 0, %s24
    %s18 = sphi 0, %s16
    %s19 = sphi 0, %s17
    %s20 = sphi 0, %s18
    %s21 = sphi 0, %s19
    %s33 = sphi 0, %s35
    %s36 = sphi 0, %s33
    %s37 = sphi 0, %s36
    %s53 = sphi 0, %s37
    %s59 = sphi 0, %s61
    %s62 = sphi 0, %s59
    %s63 = sphi 0, %s62
    %s79 = sphi 0, %s63
    %s83 = sphi 0, %s83
    %s85 = sphi 0, %s83
    %s86 = sphi 0, %s85
    %s100 = sphi 0, %s86
    %s106 = sphi 0, %s108
    %s109 = sphi 0, %s106
    %s110 = sphi 0, %s109
    %s126 = sphi 0, %s110
  $region4: #{discriminator_forward.3} parent=0 // loop_header_branch
    %12 = sbr.rel (%p10) target = $region8
  $region5: #{discriminator_forward.3} parent=0 // loop_body
    %s14 = ssub.s32 %s9, 1
    %s15 = ssub.s32 %s9, 2
    %s22 = sadd.s32 1, %s17
    %p23 = scmp.ge.s32.totalorder %s22, 1
    %s24 = scalar_select %p23, 0, %s22
    %s25 = sadd.s32 1, %s16
    %s26 = scalar_select %p23, %s25, %s16
    %p27 = scmp.ge.s32.totalorder %s26, 2
    %s28 = scalar_select %p27, 0, %s26
    %s29 = ssub.s32 %s16, %s28
    %s30 = ssub.s32 %s17, %s24
    %s31 = sor.u32 %s29, %s30
    %p32 = scmp.eq.s32.totalorder %s31, 0
    %s34 = sadd.s32 %s33, 1
    %s35 = scalar_select %p32, %s33, %s34
    %p38 = pneg %p32
    %p39 = scmp.eq.s32.totalorder %s9, 1
    %p40 = por %p38, %p39
    %p41 = scmp.ne.s32.totalorder %s33, %s36
    %p42 = scmp.eq.s32.totalorder %s9, 0
    %p43 = por %p41, %p42
    %p44 = scmp.ne.s32.totalorder %s33, %s36
    %p45 = scmp.eq.s32.totalorder %s14, 1
    %p46 = por %p44, %p45
    %p47 = scmp.ne.s32.totalorder %s36, %s37
    %p48 = scmp.eq.s32.totalorder %s14, 0
    %p49 = por %p47, %p48
    %p50 = scmp.ne.s32.totalorder %s36, %s37
    %p51 = scmp.eq.s32.totalorder %s15, 1
    %p52 = por %p50, %p51
    %p54 = scmp.ne.s32.totalorder %s37, %s53
    %p55 = scmp.eq.s32.totalorder %s15, 0
    %p56 = por %p54, %p55
    %s57 = ssub.s32 %s17, %s24
    %p58 = scmp.eq.s32.totalorder %s57, 0
    %s60 = sadd.s32 %s59, 1
    %s61 = scalar_select %p58, %s59, %s60
    %p64 = pneg %p58
    %p65 = scmp.eq.s32.totalorder %s9, 1
    %p66 = por %p64, %p65
    %p67 = scmp.ne.s32.totalorder %s59, %s62
    %p68 = scmp.eq.s32.totalorder %s9, 0
    %p69 = por %p67, %p68
    %p70 = scmp.ne.s32.totalorder %s59, %s62
    %p71 = scmp.eq.s32.totalorder %s14, 1
    %p72 = por %p70, %p71
    %p73 = scmp.ne.s32.totalorder %s62, %s63
    %p74 = scmp.eq.s32.totalorder %s14, 0
    %p75 = por %p73, %p74
    %p76 = scmp.ne.s32.totalorder %s62, %s63
    %p77 = scmp.eq.s32.totalorder %s15, 1
    %p78 = por %p76, %p77
    %p80 = scmp.ne.s32.totalorder %s63, %s79
    %p81 = scmp.eq.s32.totalorder %s15, 0
    %p82 = por %p80, %p81
    %s84 = sadd.s32 %s83, 1
    %p87 = scmp.eq.s32.totalorder %s9, 1
    %p88 = scmp.ne.s32.totalorder %s83, %s85
    %p89 = scmp.eq.s32.totalorder %s9, 0
    %p90 = por %p88, %p89
    %p91 = scmp.ne.s32.totalorder %s83, %s85
    %p92 = scmp.eq.s32.totalorder %s14, 1
    %p93 = por %p91, %p92
    %p94 = scmp.ne.s32.totalorder %s85, %s86
    %p95 = scmp.eq.s32.totalorder %s14, 0
    %p96 = por %p94, %p95
    %p97 = scmp.ne.s32.totalorder %s85, %s86
    %p98 = scmp.eq.s32.totalorder %s15, 1
    %p99 = por %p97, %p98
    %p101 = scmp.ne.s32.totalorder %s86, %s100
    %p102 = scmp.eq.s32.totalorder %s15, 0
    %p103 = por %p101, %p102
    %s104 = ssub.s32 %s16, %s28
    %p105 = scmp.eq.s32.totalorder %s104, 0
    %s107 = sadd.s32 %s106, 1
    %s108 = scalar_select %p105, %s106, %s107
    %p111 = pneg %p105
    %p112 = scmp.eq.s32.totalorder %s9, 1
    %p113 = por %p111, %p112
    %p114 = scmp.ne.s32.totalorder %s106, %s109
    %p115 = scmp.eq.s32.totalorder %s9, 0
    %p116 = por %p114, %p115
    %p117 = scmp.ne.s32.totalorder %s106, %s109
    %p118 = scmp.eq.s32.totalorder %s14, 1
    %p119 = por %p117, %p118
    %p120 = scmp.ne.s32.totalorder %s109, %s110
    %p121 = scmp.eq.s32.totalorder %s14, 0
    %p122 = por %p120, %p121
    %p123 = scmp.ne.s32.totalorder %s109, %s110
    %p124 = scmp.eq.s32.totalorder %s15, 1
    %p125 = por %p123, %p124
    %p127 = scmp.ne.s32.totalorder %s110, %s126
    %p128 = scmp.eq.s32.totalorder %s15, 0
    %p129 = por %p127, %p128
    %p130 = scmp.le.s32.totalorder 1, %s9
    %p131 = scmp.lt.s32.totalorder %s9, 3
    %p132 = pnand %p130, %p131
    %p133 = pneg %p132
    // Predicated region
    $region9: #{discriminator_forward.3} parent=5 // pred_check
      _
    $region10: #{discriminator_forward.3} parent=5 // pred_check_branch
      %135 = sbr.rel (%p132) target = $region12
    $region11: #{discriminator_forward.3} parent=5 // pred_region
      %s136 = ssub.s32 %s9, 1
      // Predicated region
      $region13: #{discriminator_forward.3} parent=11 // pred_check
        %p137 = pneg %p75
      $region14: #{discriminator_forward.3} parent=11 // pred_check_branch
        %139 = sbr.rel (%p137) target = $region16
      $region15: #{discriminator_forward.3} parent=11 // pred_region
        %s140 = smul.u32 16, %s19
        %p141 = scmp.lt.s32.totalorder %s140, 15
        %s142 = scalar_select %p141, %s140, 15
        %s143 = smul.addr %s142, 4
        %s144 = scalar_lea.vmem %s1, %s143
        %s145 = smul.u32 16, %s19
      $region16: #{discriminator_forward.3} parent=11 // pred_fallthru
        _
      // Predicated region
      $region17: #{discriminator_forward.3} parent=11 // pred_check
        %p146 = pneg %p96
      $region18: #{discriminator_forward.3} parent=11 // pred_check_branch
        %148 = sbr.rel (%p146) target = $region20
      $region19: #{discriminator_forward.3} parent=11 // pred_region
        _
      $region20: #{discriminator_forward.3} parent=11 // pred_fallthru
        _
    $region12: #{discriminator_forward.3} parent=5 // pred_fallthru
      _
    %p149 = scmp.lt.s32.totalorder %s9, 2
    // Predicated region
    $region21: #{discriminator_forward.3} parent=5 // pred_check
      %p150 = pneg %p149
    $region22: #{discriminator_forward.3} parent=5 // pred_check_branch
      %152 = sbr.rel (%p150) target = $region24
    $region23: #{discriminator_forward.3} parent=5 // pred_region
      // Predicated region
      $region25: #{discriminator_forward.3} parent=23 // pred_check
        %p153 = pneg %p43
      $region26: #{discriminator_forward.3} parent=23 // pred_check_branch
        %155 = sbr.rel (%p153) target = $region28
      $region27: #{discriminator_forward.3} parent=23 // pred_region
        %s156 = smul.u32 8, %s16
        %p157 = scmp.lt.s32.totalorder %s156, 15
        %s158 = scalar_select %p157, %s156, 15
        %p159 = scmp.lt.s32.totalorder %s17, 0
        %s160 = scalar_select %p159, %s17, 0
        %s161 = sadd.s32 %s160, %s158
        %s162 = smul.addr %s161, 4
        %s163 = scalar_lea.vmem %s0, %s162
        %s164 = smul.u32 8, %s16
      $region28: #{discriminator_forward.3} parent=23 // pred_fallthru
        _
    $region24: #{discriminator_forward.3} parent=5 // pred_fallthru
      _
    %p165 = scmp.le.s32.totalorder 1, %s9
    %p166 = scmp.lt.s32.totalorder %s9, 3
    %p167 = pnand %p165, %p166
    %p168 = pneg %p167
    // Predicated region
    $region29: #{discriminator_forward.3} parent=5 // pred_check
      _
    $region30: #{discriminator_forward.3} parent=5 // pred_check_branch
      %170 = sbr.rel (%p167) target = $region32
    $region31: #{discriminator_forward.3} parent=5 // pred_region
      %s171 = ssub.s32 %s9, 1
      %s172 = smul.u32 8, %s18
      %p173 = scmp.lt.s32.totalorder %s172, 15
      %s174 = scalar_select %p173, %s172, 15
      %p175 = scmp.lt.s32.totalorder %s19, 0
      %s176 = scalar_select %p175, %s19, 0
      %s177 = sadd.s32 %s176, %s174
      %s178 = smul.addr %s177, 4
      %s179 = scalar_lea.vmem %s0, %s178
      %p180 = pneg %p49
      %p181 = pneg %p46
      %s182 = smul.u32 16, %s19
      %p183 = scmp.lt.s32.totalorder %s182, 15
      %s184 = scalar_select %p183, %s182, 15
      %s185 = smul.addr %s184, 4
      %s186 = scalar_lea.vmem %s1, %s185
      %p187 = pneg %p75
      %p188 = pneg %p72
      %p189 = pneg %p96
      %p190 = pneg %p93
      %p191 = pneg %p122
      %p192 = pneg %p119
      %s193 = smul.u32 8, %s18
      %p194 = scmp.lt.s32.totalorder %s193, 15
      %s195 = scalar_select %p194, %s193, 15
      %s196 = smul.addr %s195, 4
      %s197 = scalar_lea.vmem %s3, %s196
      %s198 = smul.u32 8, %s18
      %p199 = scmp.lt.s32.totalorder %s198, 15
      %s200 = scalar_select %p199, %s198, 15
      %p201 = scmp.lt.s32.totalorder %s19, 0
      %s202 = scalar_select %p201, %s19, 0
      %s203 = sadd.s32 %s202, %s200
      %s204 = smul.addr %s203, 4
      %s205 = scalar_lea.vmem %s0, %s204
      %s206 = smul.u32 8, %s18
      %s207 = smul.u32 16, %s19
      %p208 = scmp.lt.s32.totalorder %s207, 15
      %s209 = scalar_select %p208, %s207, 15
      %s210 = smul.addr %s209, 4
      %s211 = scalar_lea.vmem %s1, %s210
      %s212 = smul.u32 16, %s19
      %s213 = smul.u32 8, %s18
      %p214 = scmp.lt.s32.totalorder %s213, 15
      %s215 = scalar_select %p214, %s213, 15
      %s216 = smul.addr %s215, 4
      %s217 = scalar_lea.vmem %s3, %s216
      %s218 = smul.u32 8, %s18
      %p219 = scmp.eq.s32.totalorder %s19, 0
      // Predicated region
      $region33: #{discriminator_forward.3} parent=31 // pred_check
        %p220 = pneg %p219
      $region34: #{discriminator_forward.3} parent=31 // pred_check_branch
        %222 = sbr.rel (%p220) target = $region36
      $region35: #{discriminator_forward.3} parent=31 // pred_region
        %223 = vst [vmem:[#allocation2] sm:$0xff] 0.0
        %224 = vst [vmem:[#allocation2 + $0x8] sm:$0xff] 0.0
        %225 = vst [vmem:[#allocation2 + $0x10] sm:$0xff] 0.0
        %226 = vst [vmem:[#allocation2 + $0x18] sm:$0xff] 0.0
        %227 = vst [vmem:[#allocation2 + $0x20] sm:$0xff] 0.0
        %228 = vst [vmem:[#allocation2 + $0x28] sm:$0xff] 0.0
        %229 = vst [vmem:[#allocation2 + $0x30] sm:$0xff] 0.0
        %230 = vst [vmem:[#allocation2 + $0x38] sm:$0xff] 0.0
      $region36: #{discriminator_forward.3} parent=31 // pred_fallthru
        _
      %v231 = vld [vmem:[#allocation2] sm:$0xff]
      %v232 = vld [vmem:[#allocation2 + $0x8] sm:$0xff]
      %v233 = vld [vmem:[#allocation2 + $0x10] sm:$0xff]
      %v234 = vld [vmem:[#allocation2 + $0x18] sm:$0xff]
      %v235 = vld [vmem:[#allocation2 + $0x20] sm:$0xff]
      %v236 = vld [vmem:[#allocation2 + $0x28] sm:$0xff]
      %v237 = vld [vmem:[#allocation2 + $0x30] sm:$0xff]
      %v238 = vld [vmem:[#allocation2 + $0x38] sm:$0xff]
      %v239 = vld [vmem:[%s205] sm:$0xf]
      %v240 = vld [vmem:[%s205 + $0x4] sm:$0xf]
      %v241 = vld [vmem:[%s205 + $0x8] sm:$0xf]
      %v242 = vld [vmem:[%s205 + $0xc] sm:$0xf]
      %v243 = vld [vmem:[%s205 + $0x10] sm:$0xf]
      %v244 = vld [vmem:[%s205 + $0x14] sm:$0xf]
      %v245 = vld [vmem:[%s205 + $0x18] sm:$0xf]
      %v246 = vld [vmem:[%s205 + $0x1c] sm:$0xf]
      %v247 = vld [vmem:[%s211] sm:$0xf]
      %v248 = vld [vmem:[%s211 + $0x4] sm:$0xf]
      %v249 = vld [vmem:[%s211 + $0x8] sm:$0xf]
      %v250 = vld [vmem:[%s211 + $0xc] sm:$0xf]
      %v251 = vld [vmem:[%s211 + $0x10] sm:$0xf]
      %v252 = vld [vmem:[%s211 + $0x14] sm:$0xf]
      %v253 = vld [vmem:[%s211 + $0x18] sm:$0xf]
      %v254 = vld [vmem:[%s211 + $0x1c] sm:$0xf]
      %v255 = vld [vmem:[%s211 + $0x20] sm:$0xf]
      %v256 = vld [vmem:[%s211 + $0x24] sm:$0xf]
      %v257 = vld [vmem:[%s211 + $0x28] sm:$0xf]
      %v258 = vld [vmem:[%s211 + $0x2c] sm:$0xf]
      %v259 = vld [vmem:[%s211 + $0x30] sm:$0xf]
      %v260 = vld [vmem:[%s211 + $0x34] sm:$0xf]
      %v261 = vld [vmem:[%s211 + $0x38] sm:$0xf]
      %v262 = vld [vmem:[%s211 + $0x3c] sm:$0xf]
      %v271 = vunpack.c.l.b16 %v239
      %v272 = vunpack.c.l.b16 %v240
      %v273 = vunpack.c.l.b16 %v241
      %v274 = vunpack.c.l.b16 %v242
      %v275 = vunpack.c.l.b16 %v243
      %v276 = vunpack.c.l.b16 %v244
      %v277 = vunpack.c.l.b16 %v245
      %v278 = vunpack.c.l.b16 %v246
      %v279 = vpack.c.b16 %v272, %v271
      %v280 = vpack.c.b16 %v274, %v273
      %v281 = vpack.c.b16 %v276, %v275
      %v282 = vpack.c.b16 %v278, %v277
      %v303 = vunpack.c.l.b16 %v247
      %v304 = vunpack.c.l.b16 %v248
      %v305 = vunpack.c.l.b16 %v249
      %v306 = vunpack.c.l.b16 %v250
      %v307 = vunpack.c.l.b16 %v251
      %v308 = vunpack.c.l.b16 %v252
      %v309 = vunpack.c.l.b16 %v253
      %v310 = vunpack.c.l.b16 %v254
      %v311 = vunpack.c.l.b16 %v255
      %v312 = vunpack.c.l.b16 %v256
      %v313 = vunpack.c.l.b16 %v257
      %v314 = vunpack.c.l.b16 %v258
      %v315 = vunpack.c.l.b16 %v259
      %v316 = vunpack.c.l.b16 %v260
      %v317 = vunpack.c.l.b16 %v261
      %v318 = vunpack.c.l.b16 %v262
      %v319 = vpack.c.b16 %v304, %v303
      %v320 = vpack.c.b16 %v306, %v305
      %v321 = vpack.c.b16 %v308, %v307
      %v322 = vpack.c.b16 %v310, %v309
      %v323 = vpack.c.b16 %v312, %v311
      %v324 = vpack.c.b16 %v314, %v313
      %v325 = vpack.c.b16 %v316, %v315
      %v326 = vpack.c.b16 %v318, %v317
      %335 = vmatpush.bf16.msra.mxu0 %v326
      %336 = vmatpush.bf16.msra.mxu0 %v325
      %337 = vmatpush.bf16.msra.mxu0 %v324
      %338 = vmatpush.bf16.msra.mxu0 %v323
      %339 = vmatpush.bf16.msra.mxu0 %v322
      %340 = vmatpush.bf16.msra.mxu0 %v321
      %341 = vmatpush.bf16.msra.mxu0 %v320
      %342 = vmatpush.bf16.msra.mxu0 %v319
      %343 = vmatmul.bf16.gmra.mxu0 %v279
      %v344 = vpop.f32.mrf.mxu0
      %v345 = vadd.f32 0.0, %v344
      %v346 = vpop.f32.mrf.mxu0
      %v347 = vadd.f32 0.0, %v346
      %348 = vmatmul.bf16.gmra.mxu0 %v280
      %v349 = vpop.f32.mrf.mxu0
      %v350 = vadd.f32 0.0, %v349
      %v351 = vpop.f32.mrf.mxu0
      %v352 = vadd.f32 0.0, %v351
      %353 = vmatmul.bf16.gmra.mxu0 %v281
      %v354 = vpop.f32.mrf.mxu0
      %v355 = vadd.f32 0.0, %v354
      %v356 = vpop.f32.mrf.mxu0
      %v357 = vadd.f32 0.0, %v356
      %358 = vmatmul.bf16.gmra.mxu0 %v282
      %v359 = vpop.f32.mrf.mxu0
      %v360 = vadd.f32 0.0, %v359
      %v361 = vpop.f32.mrf.mxu0
      %v362 = vadd.f32 0.0, %v361
      %363 = vdwg.mxu0
      %v364 = vadd.f32 %v231, %v345
      %v365 = vadd.f32 %v232, %v347
      %v366 = vadd.f32 %v233, %v350
      %v367 = vadd.f32 %v234, %v352
      %v368 = vadd.f32 %v235, %v355
      %v369 = vadd.f32 %v236, %v357
      %v370 = vadd.f32 %v237, %v360
      %v371 = vadd.f32 %v238, %v362
      %372 = vst [vmem:[#allocation2] sm:$0xff] %v364
      %373 = vst [vmem:[#allocation2 + $0x8] sm:$0xff] %v365
      %374 = vst [vmem:[#allocation2 + $0x10] sm:$0xff] %v366
      %375 = vst [vmem:[#allocation2 + $0x18] sm:$0xff] %v367
      %376 = vst [vmem:[#allocation2 + $0x20] sm:$0xff] %v368
      %377 = vst [vmem:[#allocation2 + $0x28] sm:$0xff] %v369
      %378 = vst [vmem:[#allocation2 + $0x30] sm:$0xff] %v370
      %379 = vst [vmem:[#allocation2 + $0x38] sm:$0xff] %v371
      // Predicated region
      $region37: #{discriminator_forward.3} parent=31 // pred_check
        %p380 = pneg %p219
      $region38: #{discriminator_forward.3} parent=31 // pred_check_branch
        %382 = sbr.rel (%p380) target = $region40
      $region39: #{discriminator_forward.3} parent=31 // pred_region
        %v383 = vld [vmem:[#allocation2] sm:$0xff]
        %v384 = vld [vmem:[#allocation2 + $0x8] sm:$0xff]
        %v385 = vld [vmem:[#allocation2 + $0x10] sm:$0xff]
        %v386 = vld [vmem:[#allocation2 + $0x18] sm:$0xff]
        %v387 = vld [vmem:[#allocation2 + $0x20] sm:$0xff]
        %v388 = vld [vmem:[#allocation2 + $0x28] sm:$0xff]
        %v389 = vld [vmem:[#allocation2 + $0x30] sm:$0xff]
        %v390 = vld [vmem:[#allocation2 + $0x38] sm:$0xff]
        %v391 = vld [vmem:[%s2] sm:$0x1]
        %v393 = vperm.slane %v391, 0
        %v395 = vadd.f32 %v383, %v393
        %v396 = vadd.f32 %v384, %v393
        %v397 = vadd.f32 %v385, %v393
        %v398 = vadd.f32 %v386, %v393
        %v399 = vadd.f32 %v387, %v393
        %v400 = vadd.f32 %v388, %v393
        %v401 = vadd.f32 %v389, %v393
        %v402 = vadd.f32 %v390, %v393
        %v403 = vmul.f32 %v395, 0.01
        %v404 = vmul.f32 %v396, 0.01
        %v405 = vmul.f32 %v397, 0.01
        %v406 = vmul.f32 %v398, 0.01
        %v407 = vmul.f32 %v399, 0.01
        %v408 = vmul.f32 %v400, 0.01
        %v409 = vmul.f32 %v401, 0.01
        %v410 = vmul.f32 %v402, 0.01
        %v411 = vmax.f32 %v395, %v403
        %v412 = vmax.f32 %v396, %v404
        %v413 = vmax.f32 %v397, %v405
        %v414 = vmax.f32 %v398, %v406
        %v415 = vmax.f32 %v399, %v407
        %v416 = vmax.f32 %v400, %v408
        %v417 = vmax.f32 %v401, %v409
        %v418 = vmax.f32 %v402, %v410
        %v419 = vpack.c.bf16 %v411, %v411
        %v420 = vpack.c.bf16 %v412, %v412
        %v421 = vpack.c.bf16 %v413, %v413
        %v422 = vpack.c.bf16 %v414, %v414
        %v423 = vpack.c.bf16 %v415, %v415
        %v424 = vpack.c.bf16 %v416, %v416
        %v425 = vpack.c.bf16 %v417, %v417
        %v426 = vpack.c.bf16 %v418, %v418
        %427 = vst [vmem:[%s217] sm:$0xf] %v419
        %428 = vst [vmem:[%s217 + $0x4] sm:$0xf] %v420
        %429 = vst [vmem:[%s217 + $0x8] sm:$0xf] %v421
        %430 = vst [vmem:[%s217 + $0xc] sm:$0xf] %v422
        %431 = vst [vmem:[%s217 + $0x10] sm:$0xf] %v423
        %432 = vst [vmem:[%s217 + $0x14] sm:$0xf] %v424
        %433 = vst [vmem:[%s217 + $0x18] sm:$0xf] %v425
        %434 = vst [vmem:[%s217 + $0x1c] sm:$0xf] %v426
      $region40: #{discriminator_forward.3} parent=31 // pred_fallthru
        _
      %s435 = smul.u32 8, %s18
      %p436 = scmp.lt.s32.totalorder %s435, 15
      %s437 = scalar_select %p436, %s435, 15
      %s438 = smul.addr %s437, 4
      %s439 = scalar_lea.vmem %s3, %s438
      // Predicated region
      $region41: #{discriminator_forward.3} parent=31 // pred_check
        %p440 = pneg %p119
      $region42: #{discriminator_forward.3} parent=31 // pred_check_branch
        %442 = sbr.rel (%p440) target = $region44
      $region43: #{discriminator_forward.3} parent=31 // pred_region
        %s443 = smul.u32 8, %s18
      $region44: #{discriminator_forward.3} parent=31 // pred_fallthru
        _
    $region32: #{discriminator_forward.3} parent=5 // pred_fallthru
      _
    %p444 = scmp.le.s32.totalorder 2, %s9
    // Predicated region
    $region45: #{discriminator_forward.3} parent=5 // pred_check
      %p445 = pneg %p444
    $region46: #{discriminator_forward.3} parent=5 // pred_check_branch
      %447 = sbr.rel (%p445) target = $region48
    $region47: #{discriminator_forward.3} parent=5 // pred_region
      %s448 = ssub.s32 %s9, 2
      // Predicated region
      $region49: #{discriminator_forward.3} parent=47 // pred_check
        %p449 = pneg %p125
      $region50: #{discriminator_forward.3} parent=47 // pred_check_branch
        %451 = sbr.rel (%p449) target = $region52
      $region51: #{discriminator_forward.3} parent=47 // pred_region
        %s452 = smul.u32 8, %s20
        %p453 = scmp.lt.s32.totalorder %s452, 15
        %s454 = scalar_select %p453, %s452, 15
        %s455 = smul.addr %s454, 4
        %s456 = scalar_lea.vmem %s3, %s455
      $region52: #{discriminator_forward.3} parent=47 // pred_fallthru
        _
    $region48: #{discriminator_forward.3} parent=5 // pred_fallthru
      _
  $region6: #{discriminator_forward.3} parent=0 // loop_footer
    %s13 = sadd.s32 1, %s9
  $region7: #{discriminator_forward.3} parent=0 // loop_footer_branch
    %8 = sbr.rel target = $region3
  $region8: #{discriminator_forward.3} parent=0 // loop_exit
    _

</llo_original>
